<compile_context>
chip_gen: v5e
topology: v5e:2x2
jax: 0.10.0
libtpu: 0.0.40
codegen_flags: <defaults>
</compile_context>

<pallas_src>
import functools

import jax
import jax.numpy as jnp
from jax.experimental import pallas as pl
from jax.experimental.pallas import tpu as pltpu


# bf16 MXU operands (v6e/v7x native); accumulation stays f32.
_MATMUL_DTYPE = jnp.bfloat16


def _cshift(a, k):
    """Circular shift along the last (lane) axis: result[..., i] = a[..., (i+k) % L].

    Implemented with an explicit lane slice+concat (unambiguous semantics, tiny
    copy at these sizes); could be swapped for pltpu.roll to hit the XLU slot.
    """
    if k == 0:
        return a
    return jnp.concatenate([a[:, k:], a[:, :k]], axis=1)


def _conv3x3_taps(a, H, W):
    """a: (C, H*W) -> 9 shifted views (dy, dx order) with 1-px reflect padding.

    Row/column neighbours are lane shifts on the flat layout; border lanes are
    patched with `where` masks so they reflect exactly like
    nn.Conv2d(padding='same', padding_mode='reflect').
    """
    lane = jax.lax.broadcasted_iota(jnp.int32, a.shape, 1)
    col = lane % W
    # Row neighbours (reflect at the first/last image row).
    up = jnp.where(lane < W, _cshift(a, W), _cshift(a, -W))              # x[r-1, w]
    dn = jnp.where(lane >= (H - 1) * W, _cshift(a, -W), _cshift(a, W))   # x[r+1, w]
    taps = []
    for v in (up, a, dn):                                                # dy = 0, 1, 2
        left = jnp.where(col == 0, _cshift(v, 1), _cshift(v, -1))        # v[r, w-1]
        right = jnp.where(col == W - 1, _cshift(v, -1), _cshift(v, 1))   # v[r, w+1]
        taps.extend([left, v, right])                                    # dx = 0, 1, 2
    return taps


def _conv3x3(a_f32, w_ref, b_ref, H, W, slope):
    """Channel-major reflect-pad 3x3 conv + bias + LeakyReLU.

    a_f32: (Cin, H*W) f32; w_ref: (9, Cout, Cin); b_ref: (Cout, 1).
    Returns (Cout, H*W) f32.  Nine accumulated (Cout,Cin)@(Cin,H*W) MXU dots.
    """
    taps = _conv3x3_taps(a_f32.astype(_MATMUL_DTYPE), H, W)
    acc = None
    for k in range(9):
        d = jnp.dot(w_ref[k], taps[k], preferred_element_type=jnp.float32)
        acc = d if acc is None else acc + d
    acc = acc + b_ref[...].astype(jnp.float32)
    return jnp.where(acc >= 0, acc, jnp.float32(slope) * acc)


def _up_block_kernel(x_ref, w1_ref, b1_ref, w2_ref, b2_ref, wup_ref, bup_ref,
                     o_ref, *, H, W, Cin, Cout, skip1, slope):
    del Cin, Cout  # shapes are carried by the refs
    x = x_ref[0].astype(jnp.float32)                     # (Cin, H*W), lane-dense

    # ---- ConvBlock 1 ----
    y1 = _conv3x3(x, w1_ref, b1_ref, H, W, slope)        # (Cout, H*W)
    if skip1:                                            # only when Cin == Cout
        y1 = y1 + x

    # ---- ConvBlock 2 (residual always on) ----
    y2 = _conv3x3(y1, w2_ref, b2_ref, H, W, slope) + y1  # (Cout, H*W) f32

    # ---- ConvTranspose2d(3, stride=2, pad=1, out_pad=1): polyphase, live taps only.
    # out[o, 2r+py, 2c+px] = b[o] + sum over the live (kh, kw) of
    #   W[i, o, kh, kw] * h[i, r + (kh==0), c + (kw==0)]   (zero past the edge).
    h = y2.astype(_MATMUL_DTYPE)
    lane = jax.lax.broadcasted_iota(jnp.int32, h.shape, 1)
    col = lane % W
    zero = jnp.zeros_like(h)
    s01 = jnp.where(col == W - 1, zero, _cshift(h, 1))           # h[r,   c+1]
    s10 = jnp.where(lane >= (H - 1) * W, zero, _cshift(h, W))    # h[r+1, c  ]
    s11 = jnp.where(col == W - 1, zero, _cshift(s10, 1))         # h[r+1, c+1]

    def U(kh, kw):
        return wup_ref[kh * 3 + kw]                              # (Cout, Cout)

    f32 = jnp.float32
    bup = bup_ref[...].astype(f32)                               # (Cout, 1)
    p00 = jnp.dot(U(1, 1), h, preferred_element_type=f32) + bup
    p01 = (jnp.dot(U(1, 2), h, preferred_element_type=f32)
           + jnp.dot(U(1, 0), s01, preferred_element_type=f32) + bup)
    p10 = (jnp.dot(U(2, 1), h, preferred_element_type=f32)
           + jnp.dot(U(0, 1), s10, preferred_element_type=f32) + bup)
    p11 = (jnp.dot(U(2, 2), h, preferred_element_type=f32)
           + jnp.dot(U(2, 0), s01, preferred_element_type=f32)
           + jnp.dot(U(0, 2), s10, preferred_element_type=f32)
           + jnp.dot(U(0, 0), s11, preferred_element_type=f32) + bup)

    # Parity planes, lane-dense (Cout, H*W) stores; interleave happens in wrapper.
    dt = o_ref.dtype
    o_ref[0, 0, 0] = p00.astype(dt)
    o_ref[0, 0, 1] = p01.astype(dt)
    o_ref[0, 1, 0] = p10.astype(dt)
    o_ref[0, 1, 1] = p11.astype(dt)


# ------------------------- weight packing (wrapper side) -------------------------
def _pack_conv_weight(w_oihw):
    """nn.Conv2d weight (O, I, 3, 3) -> (9, O, I); k = dy*3+dx, M_k[o,i] = w[o,i,dy,dx]."""
    O, I, _, _ = w_oihw.shape
    return jnp.transpose(w_oihw, (2, 3, 0, 1)).reshape(9, O, I).astype(_MATMUL_DTYPE)


def _pack_upconv_weight(w_iokk):
    """nn.ConvTranspose2d weight (I, O, 3, 3) -> (9, O, I); k = kh*3+kw, M_k[o,i] = w[i,o,kh,kw]."""
    I, O, _, _ = w_iokk.shape
    return jnp.transpose(w_iokk, (2, 3, 1, 0)).reshape(9, O, I).astype(_MATMUL_DTYPE)


def init_up_block_params(key, channels_in, channels_out):
    ks = jax.random.split(key, 6)
    s = 0.1
    return {
        # nn.Conv2d weight layout: (out, in, kH, kW)
        "conv1_w": s * jax.random.normal(ks[0], (channels_out, channels_in, 3, 3), jnp.float32),
        "conv1_b": s * jax.random.normal(ks[1], (channels_out,), jnp.float32),
        "conv2_w": s * jax.random.normal(ks[2], (channels_out, channels_out, 3, 3), jnp.float32),
        "conv2_b": s * jax.random.normal(ks[3], (channels_out,), jnp.float32),
        # nn.ConvTranspose2d weight layout: (in, out, kH, kW)
        "up_w": s * jax.random.normal(ks[4], (channels_out, channels_out, 3, 3), jnp.float32),
        "up_b": s * jax.random.normal(ks[5], (channels_out,), jnp.float32),
    }


def up_block_forward(x_nchw, params, channels_in, channels_out):
    N, Cin, H, W = x_nchw.shape
    Cout = channels_out
    HW = H * W

    x = x_nchw.reshape(N, Cin, HW)                       # free (row-major view)

    w1 = _pack_conv_weight(params["conv1_w"])            # (9, Cout, Cin)  bf16
    w2 = _pack_conv_weight(params["conv2_w"])            # (9, Cout, Cout) bf16
    wup = _pack_upconv_weight(params["up_w"])            # (9, Cout, Cout) bf16
    b1 = params["conv1_b"].reshape(Cout, 1).astype(jnp.float32)
    b2 = params["conv2_b"].reshape(Cout, 1).astype(jnp.float32)
    bup = params["up_b"].reshape(Cout, 1).astype(jnp.float32)

    kernel = functools.partial(
        _up_block_kernel, H=H, W=W, Cin=Cin, Cout=Cout,
        skip1=(channels_in == channels_out), slope=0.1)

    out = pl.pallas_call(
        kernel,
        out_shape=jax.ShapeDtypeStruct((N, 2, 2, Cout, HW), x_nchw.dtype),
        grid=(N,),
        in_specs=[
            pl.BlockSpec((1, Cin, HW), lambda n: (n, 0, 0)),
            pl.BlockSpec((9, Cout, Cin), lambda n: (0, 0, 0)),
            pl.BlockSpec((Cout, 1), lambda n: (0, 0)),
            pl.BlockSpec((9, Cout, Cout), lambda n: (0, 0, 0)),
            pl.BlockSpec((Cout, 1), lambda n: (0, 0)),
            pl.BlockSpec((9, Cout, Cout), lambda n: (0, 0, 0)),
            pl.BlockSpec((Cout, 1), lambda n: (0, 0)),
        ],
        out_specs=pl.BlockSpec((1, 2, 2, Cout, HW), lambda n: (n, 0, 0, 0, 0)),
        compiler_params=pltpu.CompilerParams(
            dimension_semantics=("parallel",),
            vmem_limit_bytes=32 * 1024 * 1024),
    )(x, w1, b1, w2, b2, wup, bup)

    # Parity planes -> NCHW pixel shuffle: reshapes are free, the transpose is
    # the single remaining wrapper-side copy (the kernel does no interleave).
    out = out.reshape(N, 2, 2, Cout, H, W)
    out = jnp.transpose(out, (0, 3, 4, 1, 5, 2))         # (N, Cout, H, 2, W, 2)
    return out.reshape(N, Cout, 2 * H, 2 * W)


# ----------------------- pure-JAX reference (for self-check) -----------------------
def _ref_conv_block(x, w_oihw, b, skip):
    xp = jnp.pad(x, ((0, 0), (1, 1), (1, 1), (0, 0)), mode="reflect")
    y = jax.lax.conv_general_dilated(
        xp, jnp.transpose(w_oihw, (2, 3, 1, 0)), (1, 1), "VALID",
        dimension_numbers=("NHWC", "HWIO", "NHWC")) + b
    y = jnp.where(y >= 0, y, 0.1 * y)
    if skip:
        y = y + x
    return y


def up_block_reference(x_nchw, params, channels_in, channels_out):
    x = jnp.transpose(x_nchw, (0, 2, 3, 1))
    x = _ref_conv_block(x, params["conv1_w"], params["conv1_b"],
                        channels_in == channels_out)
    x = _ref_conv_block(x, params["conv2_w"], params["conv2_b"], True)
    w_eq = jnp.transpose(params["up_w"][:, :, ::-1, ::-1], (2, 3, 0, 1))
    y = jax.lax.conv_general_dilated(
        x, w_eq, (1, 1), ((1, 2), (1, 2)), lhs_dilation=(2, 2),
        dimension_numbers=("NHWC", "HWIO", "NHWC")) + params["up_b"]
    return jnp.transpose(y, (0, 3, 1, 2))


if __name__ == "__main__":
    channels_in, channels_out = 4, 8
    key = jax.random.PRNGKey(0)
    kx, kp = jax.random.split(key)
    x = jax.random.normal(kx, (2, channels_in, 16, 16), jnp.float32)   # NCHW
    params = init_up_block_params(kp, channels_in, channels_out)

    out = jax.block_until_ready(up_block_forward(x, params, channels_in, channels_out))
    assert out.shape == (2, channels_out, 32, 32), out.shape

    ref = up_block_reference(x, params, channels_in, channels_out)
    max_err = float(jnp.max(jnp.abs(out - ref)))
    # bf16 MXU operands + f32 accumulation: rounding accumulates through the
    # residual chain, hence the loose tolerance (f32 operands give < 1e-3).
    assert max_err < 5e-2, f"max_err={max_err}"
    print("KERNEL_OK")
</pallas_src>

<mosaic_0001>
module attributes {stable_mosaic.version = 11 : i64} {
  func.func @_up_block_kernel(%arg0: i32, %arg1: memref<1x4x256xf32, #tpu.memory_space<vmem>>, %arg2: memref<9x8x4xbf16, #tpu.memory_space<vmem>>, %arg3: memref<8x1xf32, #tpu.memory_space<vmem>>, %arg4: memref<9x8x8xbf16, #tpu.memory_space<vmem>>, %arg5: memref<8x1xf32, #tpu.memory_space<vmem>>, %arg6: memref<9x8x8xbf16, #tpu.memory_space<vmem>>, %arg7: memref<8x1xf32, #tpu.memory_space<vmem>>, %arg8: memref<1x2x2x8x256xf32, #tpu.memory_space<vmem>>) attributes {dimension_semantics = [#tpu.dimension_semantics<parallel>], iteration_bounds = array<i64: 2>, scalar_prefetch = 0 : i64, scratch_operands = 0 : i64, tpu.core_type = #tpu.core_type<tc>, window_params = [{transform_indices = @transform_0, window_bounds = array<i64: 1, 4, 256>}, {pipeline_mode = #tpu.pipeline_mode<synchronous>, transform_indices = @transform_1, window_bounds = array<i64: 9, 8, 4>}, {pipeline_mode = #tpu.pipeline_mode<synchronous>, transform_indices = @transform_2, window_bounds = array<i64: 8, 1>}, {pipeline_mode = #tpu.pipeline_mode<synchronous>, transform_indices = @transform_3, window_bounds = array<i64: 9, 8, 8>}, {pipeline_mode = #tpu.pipeline_mode<synchronous>, transform_indices = @transform_4, window_bounds = array<i64: 8, 1>}, {pipeline_mode = #tpu.pipeline_mode<synchronous>, transform_indices = @transform_5, window_bounds = array<i64: 9, 8, 8>}, {pipeline_mode = #tpu.pipeline_mode<synchronous>, transform_indices = @transform_6, window_bounds = array<i64: 8, 1>}, {transform_indices = @transform_7, window_bounds = array<i64: 1, 2, 2, 8, 256>}]} {
    %c0 = arith.constant 0 : index
    %c0_0 = arith.constant 0 : index
    %c0_1 = arith.constant 0 : index
    %0 = vector.load %arg1[%c0, %c0_0, %c0_1] : memref<1x4x256xf32, #tpu.memory_space<vmem>>, vector<1x4x256xf32>
    %1 = vector.shape_cast %0 : vector<1x4x256xf32> to vector<4x256xf32>
    %2 = arith.truncf %1 : vector<4x256xf32> to vector<4x256xbf16>
    %3 = tpu.iota {dimensions = array<i32: 1>} : vector<4x256xi32>
    %c16_i32 = arith.constant 16 : i32
    %c0_i32 = arith.constant 0 : i32
    %4 = arith.cmpi eq, %c16_i32, %c0_i32 : i32
    %c1_i32 = arith.constant 1 : i32
    %5 = arith.select %4, %c1_i32, %c16_i32 : i32
    %6 = vector.broadcast %5 : i32 to vector<4x256xi32>
    %7 = arith.remsi %3, %6 : vector<4x256xi32>
    %c0_i32_2 = arith.constant 0 : i32
    %8 = vector.broadcast %c0_i32_2 : i32 to vector<4x256xi32>
    %9 = arith.cmpi ne, %7, %8 : vector<4x256xi32>
    %c0_i32_3 = arith.constant 0 : i32
    %10 = vector.broadcast %c0_i32_3 : i32 to vector<4x256xi32>
    %11 = arith.cmpi slt, %7, %10 : vector<4x256xi32>
    %c0_i32_4 = arith.constant 0 : i32
    %12 = arith.cmpi slt, %5, %c0_i32_4 : i32
    %13 = vector.broadcast %12 : i1 to vector<4x256xi1>
    %14 = vector.broadcast %13 : vector<4x256xi1> to vector<4x256xi1>
    %15 = arith.xori %11, %14 : vector<4x256xi1>
    %16 = arith.andi %15, %9 : vector<4x256xi1>
    %17 = vector.broadcast %5 : i32 to vector<4x256xi32>
    %18 = arith.addi %7, %17 : vector<4x256xi32>
    %19 = arith.select %16, %18, %7 : vector<4x256xi1>, vector<4x256xi32>
    %c16_i32_5 = arith.constant 16 : i32
    %20 = vector.broadcast %c16_i32_5 : i32 to vector<4x256xi32>
    %21 = arith.cmpi slt, %3, %20 : vector<4x256xi32>
    %22 = vector.extract_strided_slice %2 {offsets = [0, 16], sizes = [4, 240], strides = [1, 1]} : vector<4x256xbf16> to vector<4x240xbf16>
    %23 = vector.extract_strided_slice %2 {offsets = [0, 0], sizes = [4, 16], strides = [1, 1]} : vector<4x256xbf16> to vector<4x16xbf16>
    %24 = tpu.concatenate %22, %23 in 1 : vector<4x240xbf16>, vector<4x16xbf16> -> vector<4x256xbf16>
    %25 = vector.extract_strided_slice %2 {offsets = [0, 240], sizes = [4, 16], strides = [1, 1]} : vector<4x256xbf16> to vector<4x16xbf16>
    %26 = vector.extract_strided_slice %2 {offsets = [0, 0], sizes = [4, 240], strides = [1, 1]} : vector<4x256xbf16> to vector<4x240xbf16>
    %27 = tpu.concatenate %25, %26 in 1 : vector<4x16xbf16>, vector<4x240xbf16> -> vector<4x256xbf16>
    %28 = arith.select %21, %24, %27 : vector<4x256xi1>, vector<4x256xbf16>
    %c240_i32 = arith.constant 240 : i32
    %29 = vector.broadcast %c240_i32 : i32 to vector<4x256xi32>
    %30 = arith.cmpi sge, %3, %29 : vector<4x256xi32>
    %31 = vector.extract_strided_slice %2 {offsets = [0, 240], sizes = [4, 16], strides = [1, 1]} : vector<4x256xbf16> to vector<4x16xbf16>
    %32 = vector.extract_strided_slice %2 {offsets = [0, 0], sizes = [4, 240], strides = [1, 1]} : vector<4x256xbf16> to vector<4x240xbf16>
    %33 = tpu.concatenate %31, %32 in 1 : vector<4x16xbf16>, vector<4x240xbf16> -> vector<4x256xbf16>
    %34 = vector.extract_strided_slice %2 {offsets = [0, 16], sizes = [4, 240], strides = [1, 1]} : vector<4x256xbf16> to vector<4x240xbf16>
    %35 = vector.extract_strided_slice %2 {offsets = [0, 0], sizes = [4, 16], strides = [1, 1]} : vector<4x256xbf16> to vector<4x16xbf16>
    %36 = tpu.concatenate %34, %35 in 1 : vector<4x240xbf16>, vector<4x16xbf16> -> vector<4x256xbf16>
    %37 = arith.select %30, %33, %36 : vector<4x256xi1>, vector<4x256xbf16>
    %c0_i32_6 = arith.constant 0 : i32
    %38 = vector.broadcast %c0_i32_6 : i32 to vector<4x256xi32>
    %39 = arith.cmpi eq, %19, %38 : vector<4x256xi32>
    %40 = vector.extract_strided_slice %28 {offsets = [0, 1], sizes = [4, 255], strides = [1, 1]} : vector<4x256xbf16> to vector<4x255xbf16>
    %41 = vector.extract_strided_slice %28 {offsets = [0, 0], sizes = [4, 1], strides = [1, 1]} : vector<4x256xbf16> to vector<4x1xbf16>
    %42 = tpu.concatenate %40, %41 in 1 : vector<4x255xbf16>, vector<4x1xbf16> -> vector<4x256xbf16>
    %43 = vector.extract_strided_slice %28 {offsets = [0, 255], sizes = [4, 1], strides = [1, 1]} : vector<4x256xbf16> to vector<4x1xbf16>
    %44 = vector.extract_strided_slice %28 {offsets = [0, 0], sizes = [4, 255], strides = [1, 1]} : vector<4x256xbf16> to vector<4x255xbf16>
    %45 = tpu.concatenate %43, %44 in 1 : vector<4x1xbf16>, vector<4x255xbf16> -> vector<4x256xbf16>
    %46 = arith.select %39, %42, %45 : vector<4x256xi1>, vector<4x256xbf16>
    %c15_i32 = arith.constant 15 : i32
    %47 = vector.broadcast %c15_i32 : i32 to vector<4x256xi32>
    %48 = arith.cmpi eq, %19, %47 : vector<4x256xi32>
    %49 = vector.extract_strided_slice %28 {offsets = [0, 255], sizes = [4, 1], strides = [1, 1]} : vector<4x256xbf16> to vector<4x1xbf16>
    %50 = vector.extract_strided_slice %28 {offsets = [0, 0], sizes = [4, 255], strides = [1, 1]} : vector<4x256xbf16> to vector<4x255xbf16>
    %51 = tpu.concatenate %49, %50 in 1 : vector<4x1xbf16>, vector<4x255xbf16> -> vector<4x256xbf16>
    %52 = vector.extract_strided_slice %28 {offsets = [0, 1], sizes = [4, 255], strides = [1, 1]} : vector<4x256xbf16> to vector<4x255xbf16>
    %53 = vector.extract_strided_slice %28 {offsets = [0, 0], sizes = [4, 1], strides = [1, 1]} : vector<4x256xbf16> to vector<4x1xbf16>
    %54 = tpu.concatenate %52, %53 in 1 : vector<4x255xbf16>, vector<4x1xbf16> -> vector<4x256xbf16>
    %55 = arith.select %48, %51, %54 : vector<4x256xi1>, vector<4x256xbf16>
    %c0_i32_7 = arith.constant 0 : i32
    %56 = vector.broadcast %c0_i32_7 : i32 to vector<4x256xi32>
    %57 = arith.cmpi eq, %19, %56 : vector<4x256xi32>
    %58 = vector.extract_strided_slice %2 {offsets = [0, 1], sizes = [4, 255], strides = [1, 1]} : vector<4x256xbf16> to vector<4x255xbf16>
    %59 = vector.extract_strided_slice %2 {offsets = [0, 0], sizes = [4, 1], strides = [1, 1]} : vector<4x256xbf16> to vector<4x1xbf16>
    %60 = tpu.concatenate %58, %59 in 1 : vector<4x255xbf16>, vector<4x1xbf16> -> vector<4x256xbf16>
    %61 = vector.extract_strided_slice %2 {offsets = [0, 255], sizes = [4, 1], strides = [1, 1]} : vector<4x256xbf16> to vector<4x1xbf16>
    %62 = vector.extract_strided_slice %2 {offsets = [0, 0], sizes = [4, 255], strides = [1, 1]} : vector<4x256xbf16> to vector<4x255xbf16>
    %63 = tpu.concatenate %61, %62 in 1 : vector<4x1xbf16>, vector<4x255xbf16> -> vector<4x256xbf16>
    %64 = arith.select %57, %60, %63 : vector<4x256xi1>, vector<4x256xbf16>
    %c15_i32_8 = arith.constant 15 : i32
    %65 = vector.broadcast %c15_i32_8 : i32 to vector<4x256xi32>
    %66 = arith.cmpi eq, %19, %65 : vector<4x256xi32>
    %67 = vector.extract_strided_slice %2 {offsets = [0, 255], sizes = [4, 1], strides = [1, 1]} : vector<4x256xbf16> to vector<4x1xbf16>
    %68 = vector.extract_strided_slice %2 {offsets = [0, 0], sizes = [4, 255], strides = [1, 1]} : vector<4x256xbf16> to vector<4x255xbf16>
    %69 = tpu.concatenate %67, %68 in 1 : vector<4x1xbf16>, vector<4x255xbf16> -> vector<4x256xbf16>
    %70 = vector.extract_strided_slice %2 {offsets = [0, 1], sizes = [4, 255], strides = [1, 1]} : vector<4x256xbf16> to vector<4x255xbf16>
    %71 = vector.extract_strided_slice %2 {offsets = [0, 0], sizes = [4, 1], strides = [1, 1]} : vector<4x256xbf16> to vector<4x1xbf16>
    %72 = tpu.concatenate %70, %71 in 1 : vector<4x255xbf16>, vector<4x1xbf16> -> vector<4x256xbf16>
    %73 = arith.select %66, %69, %72 : vector<4x256xi1>, vector<4x256xbf16>
    %c0_i32_9 = arith.constant 0 : i32
    %74 = vector.broadcast %c0_i32_9 : i32 to vector<4x256xi32>
    %75 = arith.cmpi eq, %19, %74 : vector<4x256xi32>
    %76 = vector.extract_strided_slice %37 {offsets = [0, 1], sizes = [4, 255], strides = [1, 1]} : vector<4x256xbf16> to vector<4x255xbf16>
    %77 = vector.extract_strided_slice %37 {offsets = [0, 0], sizes = [4, 1], strides = [1, 1]} : vector<4x256xbf16> to vector<4x1xbf16>
    %78 = tpu.concatenate %76, %77 in 1 : vector<4x255xbf16>, vector<4x1xbf16> -> vector<4x256xbf16>
    %79 = vector.extract_strided_slice %37 {offsets = [0, 255], sizes = [4, 1], strides = [1, 1]} : vector<4x256xbf16> to vector<4x1xbf16>
    %80 = vector.extract_strided_slice %37 {offsets = [0, 0], sizes = [4, 255], strides = [1, 1]} : vector<4x256xbf16> to vector<4x255xbf16>
    %81 = tpu.concatenate %79, %80 in 1 : vector<4x1xbf16>, vector<4x255xbf16> -> vector<4x256xbf16>
    %82 = arith.select %75, %78, %81 : vector<4x256xi1>, vector<4x256xbf16>
    %c15_i32_10 = arith.constant 15 : i32
    %83 = vector.broadcast %c15_i32_10 : i32 to vector<4x256xi32>
    %84 = arith.cmpi eq, %19, %83 : vector<4x256xi32>
    %85 = vector.extract_strided_slice %37 {offsets = [0, 255], sizes = [4, 1], strides = [1, 1]} : vector<4x256xbf16> to vector<4x1xbf16>
    %86 = vector.extract_strided_slice %37 {offsets = [0, 0], sizes = [4, 255], strides = [1, 1]} : vector<4x256xbf16> to vector<4x255xbf16>
    %87 = tpu.concatenate %85, %86 in 1 : vector<4x1xbf16>, vector<4x255xbf16> -> vector<4x256xbf16>
    %88 = vector.extract_strided_slice %37 {offsets = [0, 1], sizes = [4, 255], strides = [1, 1]} : vector<4x256xbf16> to vector<4x255xbf16>
    %89 = vector.extract_strided_slice %37 {offsets = [0, 0], sizes = [4, 1], strides = [1, 1]} : vector<4x256xbf16> to vector<4x1xbf16>
    %90 = tpu.concatenate %88, %89 in 1 : vector<4x255xbf16>, vector<4x1xbf16> -> vector<4x256xbf16>
    %91 = arith.select %84, %87, %90 : vector<4x256xi1>, vector<4x256xbf16>
    %c0_11 = arith.constant 0 : index
    %c0_12 = arith.constant 0 : index
    %c0_13 = arith.constant 0 : index
    %92 = vector.load %arg2[%c0_11, %c0_12, %c0_13] : memref<9x8x4xbf16, #tpu.memory_space<vmem>>, vector<1x8x4xbf16>
    %93 = vector.shape_cast %92 : vector<1x8x4xbf16> to vector<8x4xbf16>
    %cst = arith.constant dense<0.000000e+00> : vector<8x256xf32>
    %94 = tpu.matmul %93, %46, %cst {dimension_numbers = #tpu.dot_dimension_numbers<[1], [0], [0], [1], [0, 0, 1, 1], [], []>} : vector<8x4xbf16>, vector<4x256xbf16>, vector<8x256xf32> -> vector<8x256xf32>
    %c1 = arith.constant 1 : index
    %c0_14 = arith.constant 0 : index
    %c0_15 = arith.constant 0 : index
    %95 = vector.load %arg2[%c1, %c0_14, %c0_15] : memref<9x8x4xbf16, #tpu.memory_space<vmem>>, vector<1x8x4xbf16>
    %96 = vector.shape_cast %95 : vector<1x8x4xbf16> to vector<8x4xbf16>
    %cst_16 = arith.constant dense<0.000000e+00> : vector<8x256xf32>
    %97 = tpu.matmul %96, %28, %cst_16 {dimension_numbers = #tpu.dot_dimension_numbers<[1], [0], [0], [1], [0, 0, 1, 1], [], []>} : vector<8x4xbf16>, vector<4x256xbf16>, vector<8x256xf32> -> vector<8x256xf32>
    %98 = arith.addf %94, %97 : vector<8x256xf32>
    %c2 = arith.constant 2 : index
    %c0_17 = arith.constant 0 : index
    %c0_18 = arith.constant 0 : index
    %99 = vector.load %arg2[%c2, %c0_17, %c0_18] : memref<9x8x4xbf16, #tpu.memory_space<vmem>>, vector<1x8x4xbf16>
    %100 = vector.shape_cast %99 : vector<1x8x4xbf16> to vector<8x4xbf16>
    %cst_19 = arith.constant dense<0.000000e+00> : vector<8x256xf32>
    %101 = tpu.matmul %100, %55, %cst_19 {dimension_numbers = #tpu.dot_dimension_numbers<[1], [0], [0], [1], [0, 0, 1, 1], [], []>} : vector<8x4xbf16>, vector<4x256xbf16>, vector<8x256xf32> -> vector<8x256xf32>
    %102 = arith.addf %98, %101 : vector<8x256xf32>
    %c3 = arith.constant 3 : index
    %c0_20 = arith.constant 0 : index
    %c0_21 = arith.constant 0 : index
    %103 = vector.load %arg2[%c3, %c0_20, %c0_21] : memref<9x8x4xbf16, #tpu.memory_space<vmem>>, vector<1x8x4xbf16>
    %104 = vector.shape_cast %103 : vector<1x8x4xbf16> to vector<8x4xbf16>
    %cst_22 = arith.constant dense<0.000000e+00> : vector<8x256xf32>
    %105 = tpu.matmul %104, %64, %cst_22 {dimension_numbers = #tpu.dot_dimension_numbers<[1], [0], [0], [1], [0, 0, 1, 1], [], []>} : vector<8x4xbf16>, vector<4x256xbf16>, vector<8x256xf32> -> vector<8x256xf32>
    %106 = arith.addf %102, %105 : vector<8x256xf32>
    %c4 = arith.constant 4 : index
    %c0_23 = arith.constant 0 : index
    %c0_24 = arith.constant 0 : index
    %107 = vector.load %arg2[%c4, %c0_23, %c0_24] : memref<9x8x4xbf16, #tpu.memory_space<vmem>>, vector<1x8x4xbf16>
    %108 = vector.shape_cast %107 : vector<1x8x4xbf16> to vector<8x4xbf16>
    %cst_25 = arith.constant dense<0.000000e+00> : vector<8x256xf32>
    %109 = tpu.matmul %108, %2, %cst_25 {dimension_numbers = #tpu.dot_dimension_numbers<[1], [0], [0], [1], [0, 0, 1, 1], [], []>} : vector<8x4xbf16>, vector<4x256xbf16>, vector<8x256xf32> -> vector<8x256xf32>
    %110 = arith.addf %106, %109 : vector<8x256xf32>
    %c5 = arith.constant 5 : index
    %c0_26 = arith.constant 0 : index
    %c0_27 = arith.constant 0 : index
    %111 = vector.load %arg2[%c5, %c0_26, %c0_27] : memref<9x8x4xbf16, #tpu.memory_space<vmem>>, vector<1x8x4xbf16>
    %112 = vector.shape_cast %111 : vector<1x8x4xbf16> to vector<8x4xbf16>
    %cst_28 = arith.constant dense<0.000000e+00> : vector<8x256xf32>
    %113 = tpu.matmul %112, %73, %cst_28 {dimension_numbers = #tpu.dot_dimension_numbers<[1], [0], [0], [1], [0, 0, 1, 1], [], []>} : vector<8x4xbf16>, vector<4x256xbf16>, vector<8x256xf32> -> vector<8x256xf32>
    %114 = arith.addf %110, %113 : vector<8x256xf32>
    %c6 = arith.constant 6 : index
    %c0_29 = arith.constant 0 : index
    %c0_30 = arith.constant 0 : index
    %115 = vector.load %arg2[%c6, %c0_29, %c0_30] : memref<9x8x4xbf16, #tpu.memory_space<vmem>>, vector<1x8x4xbf16>
    %116 = vector.shape_cast %115 : vector<1x8x4xbf16> to vector<8x4xbf16>
    %cst_31 = arith.constant dense<0.000000e+00> : vector<8x256xf32>
    %117 = tpu.matmul %116, %82, %cst_31 {dimension_numbers = #tpu.dot_dimension_numbers<[1], [0], [0], [1], [0, 0, 1, 1], [], []>} : vector<8x4xbf16>, vector<4x256xbf16>, vector<8x256xf32> -> vector<8x256xf32>
    %118 = arith.addf %114, %117 : vector<8x256xf32>
    %c7 = arith.constant 7 : index
    %c0_32 = arith.constant 0 : index
    %c0_33 = arith.constant 0 : index
    %119 = vector.load %arg2[%c7, %c0_32, %c0_33] : memref<9x8x4xbf16, #tpu.memory_space<vmem>>, vector<1x8x4xbf16>
    %120 = vector.shape_cast %119 : vector<1x8x4xbf16> to vector<8x4xbf16>
    %cst_34 = arith.constant dense<0.000000e+00> : vector<8x256xf32>
    %121 = tpu.matmul %120, %37, %cst_34 {dimension_numbers = #tpu.dot_dimension_numbers<[1], [0], [0], [1], [0, 0, 1, 1], [], []>} : vector<8x4xbf16>, vector<4x256xbf16>, vector<8x256xf32> -> vector<8x256xf32>
    %122 = arith.addf %118, %121 : vector<8x256xf32>
    %c8 = arith.constant 8 : index
    %c0_35 = arith.constant 0 : index
    %c0_36 = arith.constant 0 : index
    %123 = vector.load %arg2[%c8, %c0_35, %c0_36] : memref<9x8x4xbf16, #tpu.memory_space<vmem>>, vector<1x8x4xbf16>
    %124 = vector.shape_cast %123 : vector<1x8x4xbf16> to vector<8x4xbf16>
    %cst_37 = arith.constant dense<0.000000e+00> : vector<8x256xf32>
    %125 = tpu.matmul %124, %91, %cst_37 {dimension_numbers = #tpu.dot_dimension_numbers<[1], [0], [0], [1], [0, 0, 1, 1], [], []>} : vector<8x4xbf16>, vector<4x256xbf16>, vector<8x256xf32> -> vector<8x256xf32>
    %126 = arith.addf %122, %125 : vector<8x256xf32>
    %c0_38 = arith.constant 0 : index
    %c0_39 = arith.constant 0 : index
    %127 = vector.load %arg3[%c0_38, %c0_39] : memref<8x1xf32, #tpu.memory_space<vmem>>, vector<8x1xf32>
    %128 = vector.broadcast %127 : vector<8x1xf32> to vector<8x256xf32>
    %129 = arith.addf %126, %128 : vector<8x256xf32>
    %cst_40 = arith.constant 0.000000e+00 : f32
    %130 = vector.broadcast %cst_40 : f32 to vector<8x256xf32>
    %131 = arith.cmpf oge, %129, %130 : vector<8x256xf32>
    %cst_41 = arith.constant 1.000000e-01 : f32
    %132 = vector.broadcast %cst_41 : f32 to vector<8x256xf32>
    %133 = arith.mulf %132, %129 : vector<8x256xf32>
    %134 = arith.select %131, %129, %133 : vector<8x256xi1>, vector<8x256xf32>
    %135 = arith.truncf %134 : vector<8x256xf32> to vector<8x256xbf16>
    %136 = tpu.iota {dimensions = array<i32: 1>} : vector<8x256xi32>
    %c16_i32_42 = arith.constant 16 : i32
    %c0_i32_43 = arith.constant 0 : i32
    %137 = arith.cmpi eq, %c16_i32_42, %c0_i32_43 : i32
    %c1_i32_44 = arith.constant 1 : i32
    %138 = arith.select %137, %c1_i32_44, %c16_i32_42 : i32
    %139 = vector.broadcast %138 : i32 to vector<8x256xi32>
    %140 = arith.remsi %136, %139 : vector<8x256xi32>
    %c0_i32_45 = arith.constant 0 : i32
    %141 = vector.broadcast %c0_i32_45 : i32 to vector<8x256xi32>
    %142 = arith.cmpi ne, %140, %141 : vector<8x256xi32>
    %c0_i32_46 = arith.constant 0 : i32
    %143 = vector.broadcast %c0_i32_46 : i32 to vector<8x256xi32>
    %144 = arith.cmpi slt, %140, %143 : vector<8x256xi32>
    %c0_i32_47 = arith.constant 0 : i32
    %145 = arith.cmpi slt, %138, %c0_i32_47 : i32
    %146 = vector.broadcast %145 : i1 to vector<8x256xi1>
    %147 = vector.broadcast %146 : vector<8x256xi1> to vector<8x256xi1>
    %148 = arith.xori %144, %147 : vector<8x256xi1>
    %149 = arith.andi %148, %142 : vector<8x256xi1>
    %150 = vector.broadcast %138 : i32 to vector<8x256xi32>
    %151 = arith.addi %140, %150 : vector<8x256xi32>
    %152 = arith.select %149, %151, %140 : vector<8x256xi1>, vector<8x256xi32>
    %c16_i32_48 = arith.constant 16 : i32
    %153 = vector.broadcast %c16_i32_48 : i32 to vector<8x256xi32>
    %154 = arith.cmpi slt, %136, %153 : vector<8x256xi32>
    %155 = vector.extract_strided_slice %135 {offsets = [0, 16], sizes = [8, 240], strides = [1, 1]} : vector<8x256xbf16> to vector<8x240xbf16>
    %156 = vector.extract_strided_slice %135 {offsets = [0, 0], sizes = [8, 16], strides = [1, 1]} : vector<8x256xbf16> to vector<8x16xbf16>
    %157 = tpu.concatenate %155, %156 in 1 : vector<8x240xbf16>, vector<8x16xbf16> -> vector<8x256xbf16>
    %158 = vector.extract_strided_slice %135 {offsets = [0, 240], sizes = [8, 16], strides = [1, 1]} : vector<8x256xbf16> to vector<8x16xbf16>
    %159 = vector.extract_strided_slice %135 {offsets = [0, 0], sizes = [8, 240], strides = [1, 1]} : vector<8x256xbf16> to vector<8x240xbf16>
    %160 = tpu.concatenate %158, %159 in 1 : vector<8x16xbf16>, vector<8x240xbf16> -> vector<8x256xbf16>
    %161 = arith.select %154, %157, %160 : vector<8x256xi1>, vector<8x256xbf16>
    %c240_i32_49 = arith.constant 240 : i32
    %162 = vector.broadcast %c240_i32_49 : i32 to vector<8x256xi32>
    %163 = arith.cmpi sge, %136, %162 : vector<8x256xi32>
    %164 = vector.extract_strided_slice %135 {offsets = [0, 240], sizes = [8, 16], strides = [1, 1]} : vector<8x256xbf16> to vector<8x16xbf16>
    %165 = vector.extract_strided_slice %135 {offsets = [0, 0], sizes = [8, 240], strides = [1, 1]} : vector<8x256xbf16> to vector<8x240xbf16>
    %166 = tpu.concatenate %164, %165 in 1 : vector<8x16xbf16>, vector<8x240xbf16> -> vector<8x256xbf16>
    %167 = vector.extract_strided_slice %135 {offsets = [0, 16], sizes = [8, 240], strides = [1, 1]} : vector<8x256xbf16> to vector<8x240xbf16>
    %168 = vector.extract_strided_slice %135 {offsets = [0, 0], sizes = [8, 16], strides = [1, 1]} : vector<8x256xbf16> to vector<8x16xbf16>
    %169 = tpu.concatenate %167, %168 in 1 : vector<8x240xbf16>, vector<8x16xbf16> -> vector<8x256xbf16>
    %170 = arith.select %163, %166, %169 : vector<8x256xi1>, vector<8x256xbf16>
    %c0_i32_50 = arith.constant 0 : i32
    %171 = vector.broadcast %c0_i32_50 : i32 to vector<8x256xi32>
    %172 = arith.cmpi eq, %152, %171 : vector<8x256xi32>
    %173 = vector.extract_strided_slice %161 {offsets = [0, 1], sizes = [8, 255], strides = [1, 1]} : vector<8x256xbf16> to vector<8x255xbf16>
    %174 = vector.extract_strided_slice %161 {offsets = [0, 0], sizes = [8, 1], strides = [1, 1]} : vector<8x256xbf16> to vector<8x1xbf16>
    %175 = tpu.concatenate %173, %174 in 1 : vector<8x255xbf16>, vector<8x1xbf16> -> vector<8x256xbf16>
    %176 = vector.extract_strided_slice %161 {offsets = [0, 255], sizes = [8, 1], strides = [1, 1]} : vector<8x256xbf16> to vector<8x1xbf16>
    %177 = vector.extract_strided_slice %161 {offsets = [0, 0], sizes = [8, 255], strides = [1, 1]} : vector<8x256xbf16> to vector<8x255xbf16>
    %178 = tpu.concatenate %176, %177 in 1 : vector<8x1xbf16>, vector<8x255xbf16> -> vector<8x256xbf16>
    %179 = arith.select %172, %175, %178 : vector<8x256xi1>, vector<8x256xbf16>
    %c15_i32_51 = arith.constant 15 : i32
    %180 = vector.broadcast %c15_i32_51 : i32 to vector<8x256xi32>
    %181 = arith.cmpi eq, %152, %180 : vector<8x256xi32>
    %182 = vector.extract_strided_slice %161 {offsets = [0, 255], sizes = [8, 1], strides = [1, 1]} : vector<8x256xbf16> to vector<8x1xbf16>
    %183 = vector.extract_strided_slice %161 {offsets = [0, 0], sizes = [8, 255], strides = [1, 1]} : vector<8x256xbf16> to vector<8x255xbf16>
    %184 = tpu.concatenate %182, %183 in 1 : vector<8x1xbf16>, vector<8x255xbf16> -> vector<8x256xbf16>
    %185 = vector.extract_strided_slice %161 {offsets = [0, 1], sizes = [8, 255], strides = [1, 1]} : vector<8x256xbf16> to vector<8x255xbf16>
    %186 = vector.extract_strided_slice %161 {offsets = [0, 0], sizes = [8, 1], strides = [1, 1]} : vector<8x256xbf16> to vector<8x1xbf16>
    %187 = tpu.concatenate %185, %186 in 1 : vector<8x255xbf16>, vector<8x1xbf16> -> vector<8x256xbf16>
    %188 = arith.select %181, %184, %187 : vector<8x256xi1>, vector<8x256xbf16>
    %c0_i32_52 = arith.constant 0 : i32
    %189 = vector.broadcast %c0_i32_52 : i32 to vector<8x256xi32>
    %190 = arith.cmpi eq, %152, %189 : vector<8x256xi32>
    %191 = vector.extract_strided_slice %135 {offsets = [0, 1], sizes = [8, 255], strides = [1, 1]} : vector<8x256xbf16> to vector<8x255xbf16>
    %192 = vector.extract_strided_slice %135 {offsets = [0, 0], sizes = [8, 1], strides = [1, 1]} : vector<8x256xbf16> to vector<8x1xbf16>
    %193 = tpu.concatenate %191, %192 in 1 : vector<8x255xbf16>, vector<8x1xbf16> -> vector<8x256xbf16>
    %194 = vector.extract_strided_slice %135 {offsets = [0, 255], sizes = [8, 1], strides = [1, 1]} : vector<8x256xbf16> to vector<8x1xbf16>
    %195 = vector.extract_strided_slice %135 {offsets = [0, 0], sizes = [8, 255], strides = [1, 1]} : vector<8x256xbf16> to vector<8x255xbf16>
    %196 = tpu.concatenate %194, %195 in 1 : vector<8x1xbf16>, vector<8x255xbf16> -> vector<8x256xbf16>
    %197 = arith.select %190, %193, %196 : vector<8x256xi1>, vector<8x256xbf16>
    %c15_i32_53 = arith.constant 15 : i32
    %198 = vector.broadcast %c15_i32_53 : i32 to vector<8x256xi32>
    %199 = arith.cmpi eq, %152, %198 : vector<8x256xi32>
    %200 = vector.extract_strided_slice %135 {offsets = [0, 255], sizes = [8, 1], strides = [1, 1]} : vector<8x256xbf16> to vector<8x1xbf16>
    %201 = vector.extract_strided_slice %135 {offsets = [0, 0], sizes = [8, 255], strides = [1, 1]} : vector<8x256xbf16> to vector<8x255xbf16>
    %202 = tpu.concatenate %200, %201 in 1 : vector<8x1xbf16>, vector<8x255xbf16> -> vector<8x256xbf16>
    %203 = vector.extract_strided_slice %135 {offsets = [0, 1], sizes = [8, 255], strides = [1, 1]} : vector<8x256xbf16> to vector<8x255xbf16>
    %204 = vector.extract_strided_slice %135 {offsets = [0, 0], sizes = [8, 1], strides = [1, 1]} : vector<8x256xbf16> to vector<8x1xbf16>
    %205 = tpu.concatenate %203, %204 in 1 : vector<8x255xbf16>, vector<8x1xbf16> -> vector<8x256xbf16>
    %206 = arith.select %199, %202, %205 : vector<8x256xi1>, vector<8x256xbf16>
    %c0_i32_54 = arith.constant 0 : i32
    %207 = vector.broadcast %c0_i32_54 : i32 to vector<8x256xi32>
    %208 = arith.cmpi eq, %152, %207 : vector<8x256xi32>
    %209 = vector.extract_strided_slice %170 {offsets = [0, 1], sizes = [8, 255], strides = [1, 1]} : vector<8x256xbf16> to vector<8x255xbf16>
    %210 = vector.extract_strided_slice %170 {offsets = [0, 0], sizes = [8, 1], strides = [1, 1]} : vector<8x256xbf16> to vector<8x1xbf16>
    %211 = tpu.concatenate %209, %210 in 1 : vector<8x255xbf16>, vector<8x1xbf16> -> vector<8x256xbf16>
    %212 = vector.extract_strided_slice %170 {offsets = [0, 255], sizes = [8, 1], strides = [1, 1]} : vector<8x256xbf16> to vector<8x1xbf16>
    %213 = vector.extract_strided_slice %170 {offsets = [0, 0], sizes = [8, 255], strides = [1, 1]} : vector<8x256xbf16> to vector<8x255xbf16>
    %214 = tpu.concatenate %212, %213 in 1 : vector<8x1xbf16>, vector<8x255xbf16> -> vector<8x256xbf16>
    %215 = arith.select %208, %211, %214 : vector<8x256xi1>, vector<8x256xbf16>
    %c15_i32_55 = arith.constant 15 : i32
    %216 = vector.broadcast %c15_i32_55 : i32 to vector<8x256xi32>
    %217 = arith.cmpi eq, %152, %216 : vector<8x256xi32>
    %218 = vector.extract_strided_slice %170 {offsets = [0, 255], sizes = [8, 1], strides = [1, 1]} : vector<8x256xbf16> to vector<8x1xbf16>
    %219 = vector.extract_strided_slice %170 {offsets = [0, 0], sizes = [8, 255], strides = [1, 1]} : vector<8x256xbf16> to vector<8x255xbf16>
    %220 = tpu.concatenate %218, %219 in 1 : vector<8x1xbf16>, vector<8x255xbf16> -> vector<8x256xbf16>
    %221 = vector.extract_strided_slice %170 {offsets = [0, 1], sizes = [8, 255], strides = [1, 1]} : vector<8x256xbf16> to vector<8x255xbf16>
    %222 = vector.extract_strided_slice %170 {offsets = [0, 0], sizes = [8, 1], strides = [1, 1]} : vector<8x256xbf16> to vector<8x1xbf16>
    %223 = tpu.concatenate %221, %222 in 1 : vector<8x255xbf16>, vector<8x1xbf16> -> vector<8x256xbf16>
    %224 = arith.select %217, %220, %223 : vector<8x256xi1>, vector<8x256xbf16>
    %c0_56 = arith.constant 0 : index
    %c0_57 = arith.constant 0 : index
    %c0_58 = arith.constant 0 : index
    %225 = vector.load %arg4[%c0_56, %c0_57, %c0_58] : memref<9x8x8xbf16, #tpu.memory_space<vmem>>, vector<1x8x8xbf16>
    %226 = vector.shape_cast %225 : vector<1x8x8xbf16> to vector<8x8xbf16>
    %cst_59 = arith.constant dense<0.000000e+00> : vector<8x256xf32>
    %227 = tpu.matmul %226, %179, %cst_59 {dimension_numbers = #tpu.dot_dimension_numbers<[1], [0], [0], [1], [0, 0, 1, 1], [], []>} : vector<8x8xbf16>, vector<8x256xbf16>, vector<8x256xf32> -> vector<8x256xf32>
    %c1_60 = arith.constant 1 : index
    %c0_61 = arith.constant 0 : index
    %c0_62 = arith.constant 0 : index
    %228 = vector.load %arg4[%c1_60, %c0_61, %c0_62] : memref<9x8x8xbf16, #tpu.memory_space<vmem>>, vector<1x8x8xbf16>
    %229 = vector.shape_cast %228 : vector<1x8x8xbf16> to vector<8x8xbf16>
    %cst_63 = arith.constant dense<0.000000e+00> : vector<8x256xf32>
    %230 = tpu.matmul %229, %161, %cst_63 {dimension_numbers = #tpu.dot_dimension_numbers<[1], [0], [0], [1], [0, 0, 1, 1], [], []>} : vector<8x8xbf16>, vector<8x256xbf16>, vector<8x256xf32> -> vector<8x256xf32>
    %231 = arith.addf %227, %230 : vector<8x256xf32>
    %c2_64 = arith.constant 2 : index
    %c0_65 = arith.constant 0 : index
    %c0_66 = arith.constant 0 : index
    %232 = vector.load %arg4[%c2_64, %c0_65, %c0_66] : memref<9x8x8xbf16, #tpu.memory_space<vmem>>, vector<1x8x8xbf16>
    %233 = vector.shape_cast %232 : vector<1x8x8xbf16> to vector<8x8xbf16>
    %cst_67 = arith.constant dense<0.000000e+00> : vector<8x256xf32>
    %234 = tpu.matmul %233, %188, %cst_67 {dimension_numbers = #tpu.dot_dimension_numbers<[1], [0], [0], [1], [0, 0, 1, 1], [], []>} : vector<8x8xbf16>, vector<8x256xbf16>, vector<8x256xf32> -> vector<8x256xf32>
    %235 = arith.addf %231, %234 : vector<8x256xf32>
    %c3_68 = arith.constant 3 : index
    %c0_69 = arith.constant 0 : index
    %c0_70 = arith.constant 0 : index
    %236 = vector.load %arg4[%c3_68, %c0_69, %c0_70] : memref<9x8x8xbf16, #tpu.memory_space<vmem>>, vector<1x8x8xbf16>
    %237 = vector.shape_cast %236 : vector<1x8x8xbf16> to vector<8x8xbf16>
    %cst_71 = arith.constant dense<0.000000e+00> : vector<8x256xf32>
    %238 = tpu.matmul %237, %197, %cst_71 {dimension_numbers = #tpu.dot_dimension_numbers<[1], [0], [0], [1], [0, 0, 1, 1], [], []>} : vector<8x8xbf16>, vector<8x256xbf16>, vector<8x256xf32> -> vector<8x256xf32>
    %239 = arith.addf %235, %238 : vector<8x256xf32>
    %c4_72 = arith.constant 4 : index
    %c0_73 = arith.constant 0 : index
    %c0_74 = arith.constant 0 : index
    %240 = vector.load %arg4[%c4_72, %c0_73, %c0_74] : memref<9x8x8xbf16, #tpu.memory_space<vmem>>, vector<1x8x8xbf16>
    %241 = vector.shape_cast %240 : vector<1x8x8xbf16> to vector<8x8xbf16>
    %cst_75 = arith.constant dense<0.000000e+00> : vector<8x256xf32>
    %242 = tpu.matmul %241, %135, %cst_75 {dimension_numbers = #tpu.dot_dimension_numbers<[1], [0], [0], [1], [0, 0, 1, 1], [], []>} : vector<8x8xbf16>, vector<8x256xbf16>, vector<8x256xf32> -> vector<8x256xf32>
    %243 = arith.addf %239, %242 : vector<8x256xf32>
    %c5_76 = arith.constant 5 : index
    %c0_77 = arith.constant 0 : index
    %c0_78 = arith.constant 0 : index
    %244 = vector.load %arg4[%c5_76, %c0_77, %c0_78] : memref<9x8x8xbf16, #tpu.memory_space<vmem>>, vector<1x8x8xbf16>
    %245 = vector.shape_cast %244 : vector<1x8x8xbf16> to vector<8x8xbf16>
    %cst_79 = arith.constant dense<0.000000e+00> : vector<8x256xf32>
    %246 = tpu.matmul %245, %206, %cst_79 {dimension_numbers = #tpu.dot_dimension_numbers<[1], [0], [0], [1], [0, 0, 1, 1], [], []>} : vector<8x8xbf16>, vector<8x256xbf16>, vector<8x256xf32> -> vector<8x256xf32>
    %247 = arith.addf %243, %246 : vector<8x256xf32>
    %c6_80 = arith.constant 6 : index
    %c0_81 = arith.constant 0 : index
    %c0_82 = arith.constant 0 : index
    %248 = vector.load %arg4[%c6_80, %c0_81, %c0_82] : memref<9x8x8xbf16, #tpu.memory_space<vmem>>, vector<1x8x8xbf16>
    %249 = vector.shape_cast %248 : vector<1x8x8xbf16> to vector<8x8xbf16>
    %cst_83 = arith.constant dense<0.000000e+00> : vector<8x256xf32>
    %250 = tpu.matmul %249, %215, %cst_83 {dimension_numbers = #tpu.dot_dimension_numbers<[1], [0], [0], [1], [0, 0, 1, 1], [], []>} : vector<8x8xbf16>, vector<8x256xbf16>, vector<8x256xf32> -> vector<8x256xf32>
    %251 = arith.addf %247, %250 : vector<8x256xf32>
    %c7_84 = arith.constant 7 : index
    %c0_85 = arith.constant 0 : index
    %c0_86 = arith.constant 0 : index
    %252 = vector.load %arg4[%c7_84, %c0_85, %c0_86] : memref<9x8x8xbf16, #tpu.memory_space<vmem>>, vector<1x8x8xbf16>
    %253 = vector.shape_cast %252 : vector<1x8x8xbf16> to vector<8x8xbf16>
    %cst_87 = arith.constant dense<0.000000e+00> : vector<8x256xf32>
    %254 = tpu.matmul %253, %170, %cst_87 {dimension_numbers = #tpu.dot_dimension_numbers<[1], [0], [0], [1], [0, 0, 1, 1], [], []>} : vector<8x8xbf16>, vector<8x256xbf16>, vector<8x256xf32> -> vector<8x256xf32>
    %255 = arith.addf %251, %254 : vector<8x256xf32>
    %c8_88 = arith.constant 8 : index
    %c0_89 = arith.constant 0 : index
    %c0_90 = arith.constant 0 : index
    %256 = vector.load %arg4[%c8_88, %c0_89, %c0_90] : memref<9x8x8xbf16, #tpu.memory_space<vmem>>, vector<1x8x8xbf16>
    %257 = vector.shape_cast %256 : vector<1x8x8xbf16> to vector<8x8xbf16>
    %cst_91 = arith.constant dense<0.000000e+00> : vector<8x256xf32>
    %258 = tpu.matmul %257, %224, %cst_91 {dimension_numbers = #tpu.dot_dimension_numbers<[1], [0], [0], [1], [0, 0, 1, 1], [], []>} : vector<8x8xbf16>, vector<8x256xbf16>, vector<8x256xf32> -> vector<8x256xf32>
    %259 = arith.addf %255, %258 : vector<8x256xf32>
    %c0_92 = arith.constant 0 : index
    %c0_93 = arith.constant 0 : index
    %260 = vector.load %arg5[%c0_92, %c0_93] : memref<8x1xf32, #tpu.memory_space<vmem>>, vector<8x1xf32>
    %261 = vector.broadcast %260 : vector<8x1xf32> to vector<8x256xf32>
    %262 = arith.addf %259, %261 : vector<8x256xf32>
    %cst_94 = arith.constant 0.000000e+00 : f32
    %263 = vector.broadcast %cst_94 : f32 to vector<8x256xf32>
    %264 = arith.cmpf oge, %262, %263 : vector<8x256xf32>
    %cst_95 = arith.constant 1.000000e-01 : f32
    %265 = vector.broadcast %cst_95 : f32 to vector<8x256xf32>
    %266 = arith.mulf %265, %262 : vector<8x256xf32>
    %267 = arith.select %264, %262, %266 : vector<8x256xi1>, vector<8x256xf32>
    %268 = arith.addf %267, %134 : vector<8x256xf32>
    %269 = arith.truncf %268 : vector<8x256xf32> to vector<8x256xbf16>
    %270 = tpu.iota {dimensions = array<i32: 1>} : vector<8x256xi32>
    %c16_i32_96 = arith.constant 16 : i32
    %c0_i32_97 = arith.constant 0 : i32
    %271 = arith.cmpi eq, %c16_i32_96, %c0_i32_97 : i32
    %c1_i32_98 = arith.constant 1 : i32
    %272 = arith.select %271, %c1_i32_98, %c16_i32_96 : i32
    %273 = vector.broadcast %272 : i32 to vector<8x256xi32>
    %274 = arith.remsi %270, %273 : vector<8x256xi32>
    %c0_i32_99 = arith.constant 0 : i32
    %275 = vector.broadcast %c0_i32_99 : i32 to vector<8x256xi32>
    %276 = arith.cmpi ne, %274, %275 : vector<8x256xi32>
    %c0_i32_100 = arith.constant 0 : i32
    %277 = vector.broadcast %c0_i32_100 : i32 to vector<8x256xi32>
    %278 = arith.cmpi slt, %274, %277 : vector<8x256xi32>
    %c0_i32_101 = arith.constant 0 : i32
    %279 = arith.cmpi slt, %272, %c0_i32_101 : i32
    %280 = vector.broadcast %279 : i1 to vector<8x256xi1>
    %281 = vector.broadcast %280 : vector<8x256xi1> to vector<8x256xi1>
    %282 = arith.xori %278, %281 : vector<8x256xi1>
    %283 = arith.andi %282, %276 : vector<8x256xi1>
    %284 = vector.broadcast %272 : i32 to vector<8x256xi32>
    %285 = arith.addi %274, %284 : vector<8x256xi32>
    %286 = arith.select %283, %285, %274 : vector<8x256xi1>, vector<8x256xi32>
    %cst_102 = arith.constant 0.000000e+00 : bf16
    %287 = vector.broadcast %cst_102 : bf16 to vector<8x256xbf16>
    %c15_i32_103 = arith.constant 15 : i32
    %288 = vector.broadcast %c15_i32_103 : i32 to vector<8x256xi32>
    %289 = arith.cmpi eq, %286, %288 : vector<8x256xi32>
    %290 = vector.extract_strided_slice %269 {offsets = [0, 1], sizes = [8, 255], strides = [1, 1]} : vector<8x256xbf16> to vector<8x255xbf16>
    %291 = vector.extract_strided_slice %269 {offsets = [0, 0], sizes = [8, 1], strides = [1, 1]} : vector<8x256xbf16> to vector<8x1xbf16>
    %292 = tpu.concatenate %290, %291 in 1 : vector<8x255xbf16>, vector<8x1xbf16> -> vector<8x256xbf16>
    %293 = arith.select %289, %287, %292 : vector<8x256xi1>, vector<8x256xbf16>
    %c240_i32_104 = arith.constant 240 : i32
    %294 = vector.broadcast %c240_i32_104 : i32 to vector<8x256xi32>
    %295 = arith.cmpi sge, %270, %294 : vector<8x256xi32>
    %296 = vector.extract_strided_slice %269 {offsets = [0, 16], sizes = [8, 240], strides = [1, 1]} : vector<8x256xbf16> to vector<8x240xbf16>
    %297 = vector.extract_strided_slice %269 {offsets = [0, 0], sizes = [8, 16], strides = [1, 1]} : vector<8x256xbf16> to vector<8x16xbf16>
    %298 = tpu.concatenate %296, %297 in 1 : vector<8x240xbf16>, vector<8x16xbf16> -> vector<8x256xbf16>
    %299 = arith.select %295, %287, %298 : vector<8x256xi1>, vector<8x256xbf16>
    %c15_i32_105 = arith.constant 15 : i32
    %300 = vector.broadcast %c15_i32_105 : i32 to vector<8x256xi32>
    %301 = arith.cmpi eq, %286, %300 : vector<8x256xi32>
    %302 = vector.extract_strided_slice %299 {offsets = [0, 1], sizes = [8, 255], strides = [1, 1]} : vector<8x256xbf16> to vector<8x255xbf16>
    %303 = vector.extract_strided_slice %299 {offsets = [0, 0], sizes = [8, 1], strides = [1, 1]} : vector<8x256xbf16> to vector<8x1xbf16>
    %304 = tpu.concatenate %302, %303 in 1 : vector<8x255xbf16>, vector<8x1xbf16> -> vector<8x256xbf16>
    %305 = arith.select %301, %287, %304 : vector<8x256xi1>, vector<8x256xbf16>
    %c0_106 = arith.constant 0 : index
    %c0_107 = arith.constant 0 : index
    %306 = vector.load %arg7[%c0_106, %c0_107] : memref<8x1xf32, #tpu.memory_space<vmem>>, vector<8x1xf32>
    %c4_108 = arith.constant 4 : index
    %c0_109 = arith.constant 0 : index
    %c0_110 = arith.constant 0 : index
    %307 = vector.load %arg6[%c4_108, %c0_109, %c0_110] : memref<9x8x8xbf16, #tpu.memory_space<vmem>>, vector<1x8x8xbf16>
    %308 = vector.shape_cast %307 : vector<1x8x8xbf16> to vector<8x8xbf16>
    %cst_111 = arith.constant dense<0.000000e+00> : vector<8x256xf32>
    %309 = tpu.matmul %308, %269, %cst_111 {dimension_numbers = #tpu.dot_dimension_numbers<[1], [0], [0], [1], [0, 0, 1, 1], [], []>} : vector<8x8xbf16>, vector<8x256xbf16>, vector<8x256xf32> -> vector<8x256xf32>
    %310 = vector.broadcast %306 : vector<8x1xf32> to vector<8x256xf32>
    %311 = arith.addf %309, %310 : vector<8x256xf32>
    %c5_112 = arith.constant 5 : index
    %c0_113 = arith.constant 0 : index
    %c0_114 = arith.constant 0 : index
    %312 = vector.load %arg6[%c5_112, %c0_113, %c0_114] : memref<9x8x8xbf16, #tpu.memory_space<vmem>>, vector<1x8x8xbf16>
    %313 = vector.shape_cast %312 : vector<1x8x8xbf16> to vector<8x8xbf16>
    %cst_115 = arith.constant dense<0.000000e+00> : vector<8x256xf32>
    %314 = tpu.matmul %313, %269, %cst_115 {dimension_numbers = #tpu.dot_dimension_numbers<[1], [0], [0], [1], [0, 0, 1, 1], [], []>} : vector<8x8xbf16>, vector<8x256xbf16>, vector<8x256xf32> -> vector<8x256xf32>
    %c3_116 = arith.constant 3 : index
    %c0_117 = arith.constant 0 : index
    %c0_118 = arith.constant 0 : index
    %315 = vector.load %arg6[%c3_116, %c0_117, %c0_118] : memref<9x8x8xbf16, #tpu.memory_space<vmem>>, vector<1x8x8xbf16>
    %316 = vector.shape_cast %315 : vector<1x8x8xbf16> to vector<8x8xbf16>
    %cst_119 = arith.constant dense<0.000000e+00> : vector<8x256xf32>
    %317 = tpu.matmul %316, %293, %cst_119 {dimension_numbers = #tpu.dot_dimension_numbers<[1], [0], [0], [1], [0, 0, 1, 1], [], []>} : vector<8x8xbf16>, vector<8x256xbf16>, vector<8x256xf32> -> vector<8x256xf32>
    %318 = arith.addf %314, %317 : vector<8x256xf32>
    %319 = vector.broadcast %306 : vector<8x1xf32> to vector<8x256xf32>
    %320 = arith.addf %318, %319 : vector<8x256xf32>
    %c7_120 = arith.constant 7 : index
    %c0_121 = arith.constant 0 : index
    %c0_122 = arith.constant 0 : index
    %321 = vector.load %arg6[%c7_120, %c0_121, %c0_122] : memref<9x8x8xbf16, #tpu.memory_space<vmem>>, vector<1x8x8xbf16>
    %322 = vector.shape_cast %321 : vector<1x8x8xbf16> to vector<8x8xbf16>
    %cst_123 = arith.constant dense<0.000000e+00> : vector<8x256xf32>
    %323 = tpu.matmul %322, %269, %cst_123 {dimension_numbers = #tpu.dot_dimension_numbers<[1], [0], [0], [1], [0, 0, 1, 1], [], []>} : vector<8x8xbf16>, vector<8x256xbf16>, vector<8x256xf32> -> vector<8x256xf32>
    %c1_124 = arith.constant 1 : index
    %c0_125 = arith.constant 0 : index
    %c0_126 = arith.constant 0 : index
    %324 = vector.load %arg6[%c1_124, %c0_125, %c0_126] : memref<9x8x8xbf16, #tpu.memory_space<vmem>>, vector<1x8x8xbf16>
    %325 = vector.shape_cast %324 : vector<1x8x8xbf16> to vector<8x8xbf16>
    %cst_127 = arith.constant dense<0.000000e+00> : vector<8x256xf32>
    %326 = tpu.matmul %325, %299, %cst_127 {dimension_numbers = #tpu.dot_dimension_numbers<[1], [0], [0], [1], [0, 0, 1, 1], [], []>} : vector<8x8xbf16>, vector<8x256xbf16>, vector<8x256xf32> -> vector<8x256xf32>
    %327 = arith.addf %323, %326 : vector<8x256xf32>
    %328 = vector.broadcast %306 : vector<8x1xf32> to vector<8x256xf32>
    %329 = arith.addf %327, %328 : vector<8x256xf32>
    %c8_128 = arith.constant 8 : index
    %c0_129 = arith.constant 0 : index
    %c0_130 = arith.constant 0 : index
    %330 = vector.load %arg6[%c8_128, %c0_129, %c0_130] : memref<9x8x8xbf16, #tpu.memory_space<vmem>>, vector<1x8x8xbf16>
    %331 = vector.shape_cast %330 : vector<1x8x8xbf16> to vector<8x8xbf16>
    %cst_131 = arith.constant dense<0.000000e+00> : vector<8x256xf32>
    %332 = tpu.matmul %331, %269, %cst_131 {dimension_numbers = #tpu.dot_dimension_numbers<[1], [0], [0], [1], [0, 0, 1, 1], [], []>} : vector<8x8xbf16>, vector<8x256xbf16>, vector<8x256xf32> -> vector<8x256xf32>
    %c6_132 = arith.constant 6 : index
    %c0_133 = arith.constant 0 : index
    %c0_134 = arith.constant 0 : index
    %333 = vector.load %arg6[%c6_132, %c0_133, %c0_134] : memref<9x8x8xbf16, #tpu.memory_space<vmem>>, vector<1x8x8xbf16>
    %334 = vector.shape_cast %333 : vector<1x8x8xbf16> to vector<8x8xbf16>
    %cst_135 = arith.constant dense<0.000000e+00> : vector<8x256xf32>
    %335 = tpu.matmul %334, %293, %cst_135 {dimension_numbers = #tpu.dot_dimension_numbers<[1], [0], [0], [1], [0, 0, 1, 1], [], []>} : vector<8x8xbf16>, vector<8x256xbf16>, vector<8x256xf32> -> vector<8x256xf32>
    %336 = arith.addf %332, %335 : vector<8x256xf32>
    %c2_136 = arith.constant 2 : index
    %c0_137 = arith.constant 0 : index
    %c0_138 = arith.constant 0 : index
    %337 = vector.load %arg6[%c2_136, %c0_137, %c0_138] : memref<9x8x8xbf16, #tpu.memory_space<vmem>>, vector<1x8x8xbf16>
    %338 = vector.shape_cast %337 : vector<1x8x8xbf16> to vector<8x8xbf16>
    %cst_139 = arith.constant dense<0.000000e+00> : vector<8x256xf32>
    %339 = tpu.matmul %338, %299, %cst_139 {dimension_numbers = #tpu.dot_dimension_numbers<[1], [0], [0], [1], [0, 0, 1, 1], [], []>} : vector<8x8xbf16>, vector<8x256xbf16>, vector<8x256xf32> -> vector<8x256xf32>
    %340 = arith.addf %336, %339 : vector<8x256xf32>
    %c0_140 = arith.constant 0 : index
    %c0_141 = arith.constant 0 : index
    %c0_142 = arith.constant 0 : index
    %341 = vector.load %arg6[%c0_140, %c0_141, %c0_142] : memref<9x8x8xbf16, #tpu.memory_space<vmem>>, vector<1x8x8xbf16>
    %342 = vector.shape_cast %341 : vector<1x8x8xbf16> to vector<8x8xbf16>
    %cst_143 = arith.constant dense<0.000000e+00> : vector<8x256xf32>
    %343 = tpu.matmul %342, %305, %cst_143 {dimension_numbers = #tpu.dot_dimension_numbers<[1], [0], [0], [1], [0, 0, 1, 1], [], []>} : vector<8x8xbf16>, vector<8x256xbf16>, vector<8x256xf32> -> vector<8x256xf32>
    %344 = arith.addf %340, %343 : vector<8x256xf32>
    %345 = vector.broadcast %306 : vector<8x1xf32> to vector<8x256xf32>
    %346 = arith.addf %344, %345 : vector<8x256xf32>
    %c0_144 = arith.constant 0 : index
    %c0_145 = arith.constant 0 : index
    %c0_146 = arith.constant 0 : index
    %c0_147 = arith.constant 0 : index
    %c0_148 = arith.constant 0 : index
    %347 = vector.load %arg8[%c0_144, %c0_145, %c0_146, %c0_147, %c0_148] : memref<1x2x2x8x256xf32, #tpu.memory_space<vmem>>, vector<1x1x1x8x256xf32>
    %348 = vector.shape_cast %347 : vector<1x1x1x8x256xf32> to vector<8x256xf32>
    %349 = vector.shape_cast %311 : vector<8x256xf32> to vector<1x1x1x8x256xf32>
    tpu.vector_store %arg8[%c0_144, %c0_145, %c0_146, %c0_147, %c0_148], %349 {strides = array<i32>} : memref<1x2x2x8x256xf32, #tpu.memory_space<vmem>>, vector<1x1x1x8x256xf32>,
    %c0_149 = arith.constant 0 : index
    %c0_150 = arith.constant 0 : index
    %c1_151 = arith.constant 1 : index
    %c0_152 = arith.constant 0 : index
    %c0_153 = arith.constant 0 : index
    %350 = vector.load %arg8[%c0_149, %c0_150, %c1_151, %c0_152, %c0_153] : memref<1x2x2x8x256xf32, #tpu.memory_space<vmem>>, vector<1x1x1x8x256xf32>
    %351 = vector.shape_cast %350 : vector<1x1x1x8x256xf32> to vector<8x256xf32>
    %352 = vector.shape_cast %320 : vector<8x256xf32> to vector<1x1x1x8x256xf32>
    tpu.vector_store %arg8[%c0_149, %c0_150, %c1_151, %c0_152, %c0_153], %352 {strides = array<i32>} : memref<1x2x2x8x256xf32, #tpu.memory_space<vmem>>, vector<1x1x1x8x256xf32>,
    %c0_154 = arith.constant 0 : index
    %c1_155 = arith.constant 1 : index
    %c0_156 = arith.constant 0 : index
    %c0_157 = arith.constant 0 : index
    %c0_158 = arith.constant 0 : index
    %353 = vector.load %arg8[%c0_154, %c1_155, %c0_156, %c0_157, %c0_158] : memref<1x2x2x8x256xf32, #tpu.memory_space<vmem>>, vector<1x1x1x8x256xf32>
    %354 = vector.shape_cast %353 : vector<1x1x1x8x256xf32> to vector<8x256xf32>
    %355 = vector.shape_cast %329 : vector<8x256xf32> to vector<1x1x1x8x256xf32>
    tpu.vector_store %arg8[%c0_154, %c1_155, %c0_156, %c0_157, %c0_158], %355 {strides = array<i32>} : memref<1x2x2x8x256xf32, #tpu.memory_space<vmem>>, vector<1x1x1x8x256xf32>,
    %c0_159 = arith.constant 0 : index
    %c1_160 = arith.constant 1 : index
    %c1_161 = arith.constant 1 : index
    %c0_162 = arith.constant 0 : index
    %c0_163 = arith.constant 0 : index
    %356 = vector.load %arg8[%c0_159, %c1_160, %c1_161, %c0_162, %c0_163] : memref<1x2x2x8x256xf32, #tpu.memory_space<vmem>>, vector<1x1x1x8x256xf32>
    %357 = vector.shape_cast %356 : vector<1x1x1x8x256xf32> to vector<8x256xf32>
    %358 = vector.shape_cast %346 : vector<8x256xf32> to vector<1x1x1x8x256xf32>
    tpu.vector_store %arg8[%c0_159, %c1_160, %c1_161, %c0_162, %c0_163], %358 {strides = array<i32>} : memref<1x2x2x8x256xf32, #tpu.memory_space<vmem>>, vector<1x1x1x8x256xf32>,
    return
  }
  func.func @transform_0(%arg0: i32) -> (i32, i32, i32) {
    %c0_i32 = arith.constant 0 : i32
    %c0_i32_0 = arith.constant 0 : i32
    %c0_i32_1 = arith.constant 0 : i32
    return %arg0, %c0_i32, %c0_i32_0 : i32, i32, i32
  }
  func.func @transform_1(%arg0: i32) -> (i32, i32, i32) {
    %c0_i32 = arith.constant 0 : i32
    %c0_i32_0 = arith.constant 0 : i32
    %c0_i32_1 = arith.constant 0 : i32
    %c0_i32_2 = arith.constant 0 : i32
    return %c0_i32, %c0_i32_0, %c0_i32_1 : i32, i32, i32
  }
  func.func @transform_2(%arg0: i32) -> (i32, i32) {
    %c0_i32 = arith.constant 0 : i32
    %c0_i32_0 = arith.constant 0 : i32
    %c0_i32_1 = arith.constant 0 : i32
    return %c0_i32, %c0_i32_0 : i32, i32
  }
  func.func @transform_3(%arg0: i32) -> (i32, i32, i32) {
    %c0_i32 = arith.constant 0 : i32
    %c0_i32_0 = arith.constant 0 : i32
    %c0_i32_1 = arith.constant 0 : i32
    %c0_i32_2 = arith.constant 0 : i32
    return %c0_i32, %c0_i32_0, %c0_i32_1 : i32, i32, i32
  }
  func.func @transform_4(%arg0: i32) -> (i32, i32) {
    %c0_i32 = arith.constant 0 : i32
    %c0_i32_0 = arith.constant 0 : i32
    %c0_i32_1 = arith.constant 0 : i32
    return %c0_i32, %c0_i32_0 : i32, i32
  }
  func.func @transform_5(%arg0: i32) -> (i32, i32, i32) {
    %c0_i32 = arith.constant 0 : i32
    %c0_i32_0 = arith.constant 0 : i32
    %c0_i32_1 = arith.constant 0 : i32
    %c0_i32_2 = arith.constant 0 : i32
    return %c0_i32, %c0_i32_0, %c0_i32_1 : i32, i32, i32
  }
  func.func @transform_6(%arg0: i32) -> (i32, i32) {
    %c0_i32 = arith.constant 0 : i32
    %c0_i32_0 = arith.constant 0 : i32
    %c0_i32_1 = arith.constant 0 : i32
    return %c0_i32, %c0_i32_0 : i32, i32
  }
  func.func @transform_7(%arg0: i32) -> (i32, i32, i32, i32, i32) {
    %c0_i32 = arith.constant 0 : i32
    %c0_i32_0 = arith.constant 0 : i32
    %c0_i32_1 = arith.constant 0 : i32
    %c0_i32_2 = arith.constant 0 : i32
    %c0_i32_3 = arith.constant 0 : i32
    return %arg0, %c0_i32, %c0_i32_0, %c0_i32_1, %c0_i32_2 : i32, i32, i32, i32, i32
  }
}

</mosaic_0001>

<llo_original>
// kernel: tpu_custom_call.1
$region0: #{tpu_custom_call.1}
  #allocation0 [shape = 'u32[]', space=smem, size = 0x4, offset = 0x4, fixed_abs, tag = 'smem constant byte address 0x4 - core index']
  #allocation1 [shape = 'u32[72,128]{1,0:T(1,128)}', space=vmem, size = 0x9000, scoped, tag = 'internal scratch']
  %s0 = inlined_call_operand.vmem [shape: f32[2,4,256], index: 0, kind: input, shape index: {}]
  %s1 = inlined_call_operand.vmem [shape: bf16[9,8,4], index: 1, kind: input, shape index: {}]
  %s2 = inlined_call_operand.vmem [shape: f32[8,1], index: 2, kind: input, shape index: {}]
  %s3 = inlined_call_operand.vmem [shape: bf16[9,8,8], index: 3, kind: input, shape index: {}]
  %s4 = inlined_call_operand.vmem [shape: f32[8,1], index: 4, kind: input, shape index: {}]
  %s5 = inlined_call_operand.vmem [shape: bf16[9,8,8], index: 5, kind: input, shape index: {}]
  %s6 = inlined_call_operand.vmem [shape: f32[8,1], index: 6, kind: input, shape index: {}]
  %s7 = inlined_call_operand.hbm [shape: f32[2,2,2,8,256], index: 7, kind: output, shape index: {}]
  %s8 = sld [smem:[#allocation0]]
  $region61: #{tpu_custom_call.1} parent=0
    _
  %s10 = ssub.s32 1, %s8
  %s11 = scalar_select 0, %s10, %s8
  $region1: #{tpu_custom_call.1} parent=0
    #allocation2 [shape = 'u8[65536]{0}', space=vmem, size = 0x10000, scoped, tag = 'output window, operand 0']
    #allocation3 [shape = 's32[2]{0}', space=sflag, size = 0x8, scoped, tag = 'scoped memory for tpu_custom_call.1']
    %12 = vsyncpa [#allocation3], 0
    %s13 = scalar_lea.sflag [#allocation3], 1
    %14 = vsyncpa %s13, 0
    loop: start=0, step=1, limit=4
    $region2: #{tpu_custom_call.1} parent=1 // loop_pre_header
      _
    $region3: #{tpu_custom_call.1} parent=1 // loop_header
      %s16 = sphi 0, %s20
      %p17 = scmp.ge.s32.totalorder %s16, 4
      %s26 = sphi 0, %s28
      %s29 = sphi 0, %s26
      %s30 = sphi 0, %s29
      %s46 = sphi 0, %s30
      %s50 = sphi 0, %s50
      %s52 = sphi 0, %s50
      %s53 = sphi 0, %s52
      %s67 = sphi 0, %s53
      %s71 = sphi 0, %s71
      %s73 = sphi 0, %s71
      %s74 = sphi 0, %s73
      %s88 = sphi 0, %s74
      %s92 = sphi 0, %s92
      %s94 = sphi 0, %s92
      %s95 = sphi 0, %s94
      %s109 = sphi 0, %s95
      %s113 = sphi 0, %s113
      %s115 = sphi 0, %s113
      %s116 = sphi 0, %s115
      %s130 = sphi 0, %s116
      %s134 = sphi 0, %s134
      %s136 = sphi 0, %s134
      %s137 = sphi 0, %s136
      %s151 = sphi 0, %s137
      %s155 = sphi 0, %s155
      %s157 = sphi 0, %s155
      %s158 = sphi 0, %s157
      %s172 = sphi 0, %s158
      %s178 = sphi 0, %s180
      %s181 = sphi 0, %s178
      %s182 = sphi 0, %s181
      %s198 = sphi 0, %s182
    $region4: #{tpu_custom_call.1} parent=1 // loop_header_branch
      %19 = sbr.rel (%p17) target = $region8
    $region5: #{tpu_custom_call.1} parent=1 // loop_body
      %s21 = ssub.s32 %s16, 1
      %s22 = ssub.s32 %s16, 2
      %s23 = sadd.s32 %s16, 1
      %s24 = ssub.s32 %s16, %s23
      %p25 = scmp.eq.s32.totalorder %s24, 0
      %s27 = sadd.s32 %s26, 1
      %s28 = scalar_select %p25, %s26, %s27
      %p31 = pneg %p25
      %p32 = scmp.eq.s32.totalorder %s16, 1
      %p33 = por %p31, %p32
      %p34 = scmp.ne.s32.totalorder %s26, %s29
      %p35 = scmp.eq.s32.totalorder %s16, 0
      %p36 = por %p34, %p35
      %p37 = scmp.ne.s32.totalorder %s26, %s29
      %p38 = scmp.eq.s32.totalorder %s21, 1
      %p39 = por %p37, %p38
      %p40 = scmp.ne.s32.totalorder %s29, %s30
      %p41 = scmp.eq.s32.totalorder %s21, 0
      %p42 = por %p40, %p41
      %p43 = scmp.ne.s32.totalorder %s29, %s30
      %p44 = scmp.eq.s32.totalorder %s22, 1
      %p45 = por %p43, %p44
      %p47 = scmp.ne.s32.totalorder %s30, %s46
      %p48 = scmp.eq.s32.totalorder %s22, 0
      %p49 = por %p47, %p48
      %s51 = sadd.s32 %s50, 1
      %p54 = scmp.eq.s32.totalorder %s16, 1
      %p55 = scmp.ne.s32.totalorder %s50, %s52
      %p56 = scmp.eq.s32.totalorder %s16, 0
      %p57 = por %p55, %p56
      %p58 = scmp.ne.s32.totalorder %s50, %s52
      %p59 = scmp.eq.s32.totalorder %s21, 1
      %p60 = por %p58, %p59
      %p61 = scmp.ne.s32.totalorder %s52, %s53
      %p62 = scmp.eq.s32.totalorder %s21, 0
      %p63 = por %p61, %p62
      %p64 = scmp.ne.s32.totalorder %s52, %s53
      %p65 = scmp.eq.s32.totalorder %s22, 1
      %p66 = por %p64, %p65
      %p68 = scmp.ne.s32.totalorder %s53, %s67
      %p69 = scmp.eq.s32.totalorder %s22, 0
      %p70 = por %p68, %p69
      %s72 = sadd.s32 %s71, 1
      %p75 = scmp.eq.s32.totalorder %s16, 1
      %p76 = scmp.ne.s32.totalorder %s71, %s73
      %p77 = scmp.eq.s32.totalorder %s16, 0
      %p78 = por %p76, %p77
      %p79 = scmp.ne.s32.totalorder %s71, %s73
      %p80 = scmp.eq.s32.totalorder %s21, 1
      %p81 = por %p79, %p80
      %p82 = scmp.ne.s32.totalorder %s73, %s74
      %p83 = scmp.eq.s32.totalorder %s21, 0
      %p84 = por %p82, %p83
      %p85 = scmp.ne.s32.totalorder %s73, %s74
      %p86 = scmp.eq.s32.totalorder %s22, 1
      %p87 = por %p85, %p86
      %p89 = scmp.ne.s32.totalorder %s74, %s88
      %p90 = scmp.eq.s32.totalorder %s22, 0
      %p91 = por %p89, %p90
      %s93 = sadd.s32 %s92, 1
      %p96 = scmp.eq.s32.totalorder %s16, 1
      %p97 = scmp.ne.s32.totalorder %s92, %s94
      %p98 = scmp.eq.s32.totalorder %s16, 0
      %p99 = por %p97, %p98
      %p100 = scmp.ne.s32.totalorder %s92, %s94
      %p101 = scmp.eq.s32.totalorder %s21, 1
      %p102 = por %p100, %p101
      %p103 = scmp.ne.s32.totalorder %s94, %s95
      %p104 = scmp.eq.s32.totalorder %s21, 0
      %p105 = por %p103, %p104
      %p106 = scmp.ne.s32.totalorder %s94, %s95
      %p107 = scmp.eq.s32.totalorder %s22, 1
      %p108 = por %p106, %p107
      %p110 = scmp.ne.s32.totalorder %s95, %s109
      %p111 = scmp.eq.s32.totalorder %s22, 0
      %p112 = por %p110, %p111
      %s114 = sadd.s32 %s113, 1
      %p117 = scmp.eq.s32.totalorder %s16, 1
      %p118 = scmp.ne.s32.totalorder %s113, %s115
      %p119 = scmp.eq.s32.totalorder %s16, 0
      %p120 = por %p118, %p119
      %p121 = scmp.ne.s32.totalorder %s113, %s115
      %p122 = scmp.eq.s32.totalorder %s21, 1
      %p123 = por %p121, %p122
      %p124 = scmp.ne.s32.totalorder %s115, %s116
      %p125 = scmp.eq.s32.totalorder %s21, 0
      %p126 = por %p124, %p125
      %p127 = scmp.ne.s32.totalorder %s115, %s116
      %p128 = scmp.eq.s32.totalorder %s22, 1
      %p129 = por %p127, %p128
      %p131 = scmp.ne.s32.totalorder %s116, %s130
      %p132 = scmp.eq.s32.totalorder %s22, 0
      %p133 = por %p131, %p132
      %s135 = sadd.s32 %s134, 1
      %p138 = scmp.eq.s32.totalorder %s16, 1
      %p139 = scmp.ne.s32.totalorder %s134, %s136
      %p140 = scmp.eq.s32.totalorder %s16, 0
      %p141 = por %p139, %p140
      %p142 = scmp.ne.s32.totalorder %s134, %s136
      %p143 = scmp.eq.s32.totalorder %s21, 1
      %p144 = por %p142, %p143
      %p145 = scmp.ne.s32.totalorder %s136, %s137
      %p146 = scmp.eq.s32.totalorder %s21, 0
      %p147 = por %p145, %p146
      %p148 = scmp.ne.s32.totalorder %s136, %s137
      %p149 = scmp.eq.s32.totalorder %s22, 1
      %p150 = por %p148, %p149
      %p152 = scmp.ne.s32.totalorder %s137, %s151
      %p153 = scmp.eq.s32.totalorder %s22, 0
      %p154 = por %p152, %p153
      %s156 = sadd.s32 %s155, 1
      %p159 = scmp.eq.s32.totalorder %s16, 1
      %p160 = scmp.ne.s32.totalorder %s155, %s157
      %p161 = scmp.eq.s32.totalorder %s16, 0
      %p162 = por %p160, %p161
      %p163 = scmp.ne.s32.totalorder %s155, %s157
      %p164 = scmp.eq.s32.totalorder %s21, 1
      %p165 = por %p163, %p164
      %p166 = scmp.ne.s32.totalorder %s157, %s158
      %p167 = scmp.eq.s32.totalorder %s21, 0
      %p168 = por %p166, %p167
      %p169 = scmp.ne.s32.totalorder %s157, %s158
      %p170 = scmp.eq.s32.totalorder %s22, 1
      %p171 = por %p169, %p170
      %p173 = scmp.ne.s32.totalorder %s158, %s172
      %p174 = scmp.eq.s32.totalorder %s22, 0
      %p175 = por %p173, %p174
      %s176 = ssub.s32 %s16, %s23
      %p177 = scmp.eq.s32.totalorder %s176, 0
      %s179 = sadd.s32 %s178, 1
      %s180 = scalar_select %p177, %s178, %s179
      %p183 = pneg %p177
      %p184 = scmp.eq.s32.totalorder %s16, 1
      %p185 = por %p183, %p184
      %p186 = scmp.ne.s32.totalorder %s178, %s181
      %p187 = scmp.eq.s32.totalorder %s16, 0
      %p188 = por %p186, %p187
      %p189 = scmp.ne.s32.totalorder %s178, %s181
      %p190 = scmp.eq.s32.totalorder %s21, 1
      %p191 = por %p189, %p190
      %p192 = scmp.ne.s32.totalorder %s181, %s182
      %p193 = scmp.eq.s32.totalorder %s21, 0
      %p194 = por %p192, %p193
      %p195 = scmp.ne.s32.totalorder %s181, %s182
      %p196 = scmp.eq.s32.totalorder %s22, 1
      %p197 = por %p195, %p196
      %p199 = scmp.ne.s32.totalorder %s182, %s198
      %p200 = scmp.eq.s32.totalorder %s22, 0
      %p201 = por %p199, %p200
      %p202 = scmp.le.s32.totalorder 1, %s16
      %p203 = scmp.lt.s32.totalorder %s16, 3
      %p204 = pnand %p202, %p203
      %p205 = pneg %p204
      // Predicated region
      $region9: #{tpu_custom_call.1} parent=5 // pred_check
        _
      $region10: #{tpu_custom_call.1} parent=5 // pred_check_branch
        %207 = sbr.rel (%p204) target = $region12
      $region11: #{tpu_custom_call.1} parent=5 // pred_region
        %s208 = ssub.s32 %s16, 1
        // Predicated region
        $region13: #{tpu_custom_call.1} parent=11 // pred_check
          %p209 = pneg %p63
        $region14: #{tpu_custom_call.1} parent=11 // pred_check_branch
          %211 = sbr.rel (%p209) target = $region16
        $region15: #{tpu_custom_call.1} parent=11 // pred_region
          _
        $region16: #{tpu_custom_call.1} parent=11 // pred_fallthru
          _
        // Predicated region
        $region17: #{tpu_custom_call.1} parent=11 // pred_check
          %p212 = pneg %p84
        $region18: #{tpu_custom_call.1} parent=11 // pred_check_branch
          %214 = sbr.rel (%p212) target = $region20
        $region19: #{tpu_custom_call.1} parent=11 // pred_region
          _
        $region20: #{tpu_custom_call.1} parent=11 // pred_fallthru
          _
        // Predicated region
        $region21: #{tpu_custom_call.1} parent=11 // pred_check
          %p215 = pneg %p105
        $region22: #{tpu_custom_call.1} parent=11 // pred_check_branch
          %217 = sbr.rel (%p215) target = $region24
        $region23: #{tpu_custom_call.1} parent=11 // pred_region
          _
        $region24: #{tpu_custom_call.1} parent=11 // pred_fallthru
          _
        // Predicated region
        $region25: #{tpu_custom_call.1} parent=11 // pred_check
          %p218 = pneg %p126
        $region26: #{tpu_custom_call.1} parent=11 // pred_check_branch
          %220 = sbr.rel (%p218) target = $region28
        $region27: #{tpu_custom_call.1} parent=11 // pred_region
          _
        $region28: #{tpu_custom_call.1} parent=11 // pred_fallthru
          _
        // Predicated region
        $region29: #{tpu_custom_call.1} parent=11 // pred_check
          %p221 = pneg %p147
        $region30: #{tpu_custom_call.1} parent=11 // pred_check_branch
          %223 = sbr.rel (%p221) target = $region32
        $region31: #{tpu_custom_call.1} parent=11 // pred_region
          _
        $region32: #{tpu_custom_call.1} parent=11 // pred_fallthru
          _
        // Predicated region
        $region33: #{tpu_custom_call.1} parent=11 // pred_check
          %p224 = pneg %p168
        $region34: #{tpu_custom_call.1} parent=11 // pred_check_branch
          %226 = sbr.rel (%p224) target = $region36
        $region35: #{tpu_custom_call.1} parent=11 // pred_region
          _
        $region36: #{tpu_custom_call.1} parent=11 // pred_fallthru
          _
      $region12: #{tpu_custom_call.1} parent=5 // pred_fallthru
        _
      %p227 = scmp.lt.s32.totalorder %s16, 2
      // Predicated region
      $region37: #{tpu_custom_call.1} parent=5 // pred_check
        %p228 = pneg %p227
      $region38: #{tpu_custom_call.1} parent=5 // pred_check_branch
        %230 = sbr.rel (%p228) target = $region40
      $region39: #{tpu_custom_call.1} parent=5 // pred_region
        // Predicated region
        $region41: #{tpu_custom_call.1} parent=39 // pred_check
          %p231 = pneg %p36
        $region42: #{tpu_custom_call.1} parent=39 // pred_check_branch
          %233 = sbr.rel (%p231) target = $region44
        $region43: #{tpu_custom_call.1} parent=39 // pred_region
          %p234 = scmp.lt.s32.totalorder %s16, 1
          %s235 = scalar_select %p234, %s16, 1
          %s236 = smul.addr %s235, 2
          %s237 = smul.addr %s236, 4
          %s238 = scalar_lea.vmem %s0, %s237
        $region44: #{tpu_custom_call.1} parent=39 // pred_fallthru
          _
      $region40: #{tpu_custom_call.1} parent=5 // pred_fallthru
        _
      %p239 = scmp.le.s32.totalorder 1, %s16
      %p240 = scmp.lt.s32.totalorder %s16, 3
      %p241 = pnand %p239, %p240
      %p242 = pneg %p241
      // Predicated region
      $region45: #{tpu_custom_call.1} parent=5 // pred_check
        _
      $region46: #{tpu_custom_call.1} parent=5 // pred_check_branch
        %244 = sbr.rel (%p241) target = $region48
      $region47: #{tpu_custom_call.1} parent=5 // pred_region
        %s245 = ssub.s32 %s16, 1
        %p246 = scmp.lt.s32.totalorder %s21, 1
        %s247 = scalar_select %p246, %s21, 1
        %s248 = smul.addr %s247, 2
        %s249 = smul.addr %s248, 4
        %s250 = scalar_lea.vmem %s0, %s249
        %p251 = pneg %p42
        %p252 = pneg %p39
        %p253 = pneg %p63
        %p254 = pneg %p60
        %p255 = pneg %p84
        %p256 = pneg %p81
        %p257 = pneg %p105
        %p258 = pneg %p102
        %p259 = pneg %p126
        %p260 = pneg %p123
        %p261 = pneg %p147
        %p262 = pneg %p144
        %p263 = pneg %p168
        %p264 = pneg %p165
        %p265 = pneg %p194
        %p266 = pneg %p191
        %s267 = sand.u32 %s181, 1
        %s268 = scalar_lea.sflag [#allocation3], %s267
        %s269 = sand.u32 %s181, 1
        %s270 = smul.addr %s269, 64
        %s271 = scalar_lea.vmem [#allocation2], %s270
        %p272 = scmp.lt.s32.totalorder %s21, 1
        %s273 = scalar_select %p272, %s21, 1
        %s274 = smul.addr %s273, 2
        %s275 = smul.addr %s274, 4
        %s276 = scalar_lea.vmem %s0, %s275
        %v280 = vld [vmem:[%s276] sm:$0xff]
        %282 = vst [vmem:[#allocation1] ss:$2 sm:$0xff] %v280
        %v283 = vld.sshfl [vmem:[#allocation1] sm:$0xff pattern:$0x75316420]
        %v284 = vld.sshfl [vmem:[#allocation1 + $0x8] sm:$0xff pattern:$0x75316420]
        %v287 = vpack.c.bf16 %v284, %v283
        %v288 = vlaneseq
        %v289 = vand.u32 %v288, 127
        %v290 = vadd.s32 %v289, 128
        %vm291 = vcmp.lt.s32.totalorder %v289, 0
        %v292 = vsub.s32 0, %v289
        %v293 = vsel %vm291, %v292, %v289
        %v294 = vshrl.u32 %v293, 4
        %v295 = vand.u32 %v293, 15
        %v296 = vsub.s32 0, %v295
        %v297 = vsel %vm291, %v296, %v295
        %vm298 = vcmp.lt.s32.totalorder %v290, 0
        %v299 = vsub.s32 0, %v290
        %v300 = vsel %vm298, %v299, %v290
        %v301 = vshrl.u32 %v300, 4
        %v302 = vand.u32 %v300, 15
        %v303 = vsub.s32 0, %v302
        %v304 = vsel %vm298, %v303, %v302
        %vm305 = vcmp.ne.s32.totalorder %v297, 0
        %vm306 = vcmp.ne.s32.totalorder %v304, 0
        %vm307 = vcmp.lt.s32.totalorder %v297, 0
        %vm308 = vcmp.lt.s32.totalorder %v304, 0
        %vm309 = vmand %vm307, %vm305
        %vm310 = vmand %vm308, %vm306
        %v311 = vadd.s32 %v297, 16
        %v312 = vadd.s32 %v304, 16
        %v313 = vsel %vm309, %v311, %v297
        %v314 = vsel %vm310, %v312, %v304
        %vm315 = vcmp.lt.s32.totalorder %v289, 16
        %vm316 = vcmp.lt.s32.totalorder %v290, 16
        %v318 = vunpack.c.l.b16 %v287
        %v319 = vunpack.c.h.b16 %v287
        %v320 = vpack.c.b16 %v318, %v318
        %v321 = vpack.c.b16 %v319, %v319
        %322 = vrot.lane.b32.xlu0 %v320, 112
        %v323 = vpop.permute.xlu0 %322
        %324 = vrot.lane.b32.xlu0 %v321, 112
        %v325 = vpop.permute.xlu0 %324
        %vm326 = vcmask 916480
        %v327 = vsel %vm326, %v323, %v325
        %vm329 = vcmask 916480
        %v332 = vsel %vm329, %v325, %v323
        %334 = vrot.lane.b32.xlu0 %v321, 16
        %v335 = vpop.permute.xlu0 %334
        %336 = vrot.lane.b32.xlu0 %v320, 16
        %v337 = vpop.permute.xlu0 %336
        %vm338 = vcmask 130048
        %v339 = vsel %vm338, %v337, %v335
        %vm341 = vcmask 130048
        %v344 = vsel %vm341, %v335, %v337
        %vm346 = vmpackc.low %vm316, %vm315
        %v347 = vsel %vm346, 65537, 0
        %v348 = vperm.slane %v347, 0
        %v349 = vperm.slane %v347, 4
        %v350 = vunpack.c.l.b16 %v348
        %v351 = vunpack.c.h.b16 %v348
        %v352 = vunpack.c.l.b16 0
        %v353 = vunpack.c.h.b16 0
        %vm354 = vcmp.ne.s32.totalorder %v350, %v352
        %vm355 = vcmp.ne.s32.totalorder %v351, %v353
        %vm356 = vmpackc.low %vm355, %vm354
        %v357 = vunpack.c.l.b16 %v349
        %v358 = vunpack.c.h.b16 %v349
        %v359 = vunpack.c.l.b16 0
        %v360 = vunpack.c.h.b16 0
        %vm361 = vcmp.ne.s32.totalorder %v357, %v359
        %vm362 = vcmp.ne.s32.totalorder %v358, %v360
        %vm363 = vmpackc.low %vm362, %vm361
        %v364 = vsel %vm356, %v327, %v344
        %v365 = vsel %vm363, %v332, %v339
        %vm366 = vcmp.ge.s32.totalorder %v289, 240
        %vm367 = vcmp.ge.s32.totalorder %v290, 240
        %vm368 = vmpackc.low %vm367, %vm366
        %v369 = vsel %vm368, 65537, 0
        %v370 = vperm.slane %v369, 0
        %v371 = vperm.slane %v369, 4
        %v372 = vunpack.c.l.b16 %v370
        %v373 = vunpack.c.h.b16 %v370
        %v374 = vunpack.c.l.b16 0
        %v375 = vunpack.c.h.b16 0
        %vm376 = vcmp.ne.s32.totalorder %v372, %v374
        %vm377 = vcmp.ne.s32.totalorder %v373, %v375
        %vm378 = vmpackc.low %vm377, %vm376
        %v379 = vunpack.c.l.b16 %v371
        %v380 = vunpack.c.h.b16 %v371
        %v381 = vunpack.c.l.b16 0
        %v382 = vunpack.c.h.b16 0
        %vm383 = vcmp.ne.s32.totalorder %v379, %v381
        %vm384 = vcmp.ne.s32.totalorder %v380, %v382
        %vm385 = vmpackc.low %vm384, %vm383
        %v386 = vsel %vm378, %v344, %v327
        %v387 = vsel %vm385, %v339, %v332
        %vm388 = vcmp.eq.s32.totalorder %v313, 0
        %vm389 = vcmp.eq.s32.totalorder %v314, 0
        %392 = vrot.lane.b32.xlu0 %v364, 127
        %v393 = vpop.permute.xlu0 %392
        %394 = vrot.lane.b32.xlu0 %v365, 127
        %v395 = vpop.permute.xlu0 %394
        %vm396 = vcmask 1039360
        %v397 = vsel %vm396, %v393, %v395
        %vm399 = vcmask 1039360
        %v402 = vsel %vm399, %v395, %v393
        %404 = vrot.lane.b32.xlu0 %v365, 1
        %v405 = vpop.permute.xlu0 %404
        %406 = vrot.lane.b32.xlu0 %v364, 1
        %v407 = vpop.permute.xlu0 %406
        %vm408 = vcmask 7168
        %v409 = vsel %vm408, %v407, %v405
        %vm411 = vcmask 7168
        %v414 = vsel %vm411, %v405, %v407
        %vm416 = vmpackc.low %vm389, %vm388
        %v417 = vsel %vm416, 65537, 0
        %v418 = vperm.slane %v417, 0
        %v419 = vperm.slane %v417, 4
        %v420 = vunpack.c.l.b16 %v418
        %v421 = vunpack.c.h.b16 %v418
        %v422 = vunpack.c.l.b16 0
        %v423 = vunpack.c.h.b16 0
        %vm424 = vcmp.ne.s32.totalorder %v420, %v422
        %vm425 = vcmp.ne.s32.totalorder %v421, %v423
        %vm426 = vmpackc.low %vm425, %vm424
        %v427 = vunpack.c.l.b16 %v419
        %v428 = vunpack.c.h.b16 %v419
        %v429 = vunpack.c.l.b16 0
        %v430 = vunpack.c.h.b16 0
        %vm431 = vcmp.ne.s32.totalorder %v427, %v429
        %vm432 = vcmp.ne.s32.totalorder %v428, %v430
        %vm433 = vmpackc.low %vm432, %vm431
        %v434 = vsel %vm426, %v397, %v414
        %v435 = vsel %vm433, %v402, %v409
        %vm436 = vcmp.eq.s32.totalorder %v313, 15
        %vm437 = vcmp.eq.s32.totalorder %v314, 15
        %vm438 = vmpackc.low %vm437, %vm436
        %v439 = vsel %vm438, 65537, 0
        %v440 = vperm.slane %v439, 0
        %v441 = vperm.slane %v439, 4
        %v442 = vunpack.c.l.b16 %v440
        %v443 = vunpack.c.h.b16 %v440
        %v444 = vunpack.c.l.b16 0
        %v445 = vunpack.c.h.b16 0
        %vm446 = vcmp.ne.s32.totalorder %v442, %v444
        %vm447 = vcmp.ne.s32.totalorder %v443, %v445
        %vm448 = vmpackc.low %vm447, %vm446
        %v449 = vunpack.c.l.b16 %v441
        %v450 = vunpack.c.h.b16 %v441
        %v451 = vunpack.c.l.b16 0
        %v452 = vunpack.c.h.b16 0
        %vm453 = vcmp.ne.s32.totalorder %v449, %v451
        %vm454 = vcmp.ne.s32.totalorder %v450, %v452
        %vm455 = vmpackc.low %vm454, %vm453
        %v456 = vsel %vm448, %v414, %v397
        %v457 = vsel %vm455, %v409, %v402
        %458 = vrot.lane.b32.xlu0 %v320, 127
        %v459 = vpop.permute.xlu0 %458
        %460 = vrot.lane.b32.xlu0 %v321, 127
        %v461 = vpop.permute.xlu0 %460
        %v462 = vsel %vm396, %v459, %v461
        %v466 = vsel %vm399, %v461, %v459
        %468 = vrot.lane.b32.xlu0 %v321, 1
        %v469 = vpop.permute.xlu0 %468
        %470 = vrot.lane.b32.xlu0 %v320, 1
        %v471 = vpop.permute.xlu0 %470
        %v472 = vsel %vm408, %v471, %v469
        %v476 = vsel %vm411, %v469, %v471
        %v478 = vsel %vm426, %v462, %v476
        %v479 = vsel %vm433, %v466, %v472
        %v480 = vsel %vm448, %v476, %v462
        %v481 = vsel %vm455, %v472, %v466
        %484 = vrot.lane.b32.xlu0 %v386, 127
        %v485 = vpop.permute.xlu0 %484
        %486 = vrot.lane.b32.xlu0 %v387, 127
        %v487 = vpop.permute.xlu0 %486
        %v488 = vsel %vm396, %v485, %v487
        %v492 = vsel %vm399, %v487, %v485
        %494 = vrot.lane.b32.xlu0 %v387, 1
        %v495 = vpop.permute.xlu0 %494
        %496 = vrot.lane.b32.xlu0 %v386, 1
        %v497 = vpop.permute.xlu0 %496
        %v498 = vsel %vm408, %v497, %v495
        %v502 = vsel %vm411, %v495, %v497
        %v504 = vsel %vm426, %v488, %v502
        %v505 = vsel %vm433, %v492, %v498
        %v506 = vsel %vm448, %v502, %v488
        %v507 = vsel %vm455, %v498, %v492
        %v508 = vld [vmem:[%s1] sm:$0xf]
        %s509 = scalar_lea.vmem %s1, 4
        %v510 = vld [vmem:[%s509] sm:$0xf]
        %vm511 = vcmask 31744
        %v513 = vsel %vm511, %v510, 0
        %vm515 = vcmask 1041408
        %v517 = vsel %vm515, %v364, 0
        %v520 = vsel %vm515, %v365, 0
        %522 = vmatpush.bf16.msra.mxu0 0
        %523 = vmatpush.bf16.msra.mxu0 0
        %524 = vmatpush.bf16.msra.mxu0 0
        %525 = vmatpush.bf16.msra.mxu0 0
        %526 = vmatpush.bf16.msra.mxu0 0
        %527 = vmatpush.bf16.msra.mxu0 0
        %528 = vmatpush.bf16.msra.mxu0 0
        %529 = vmatpush.bf16.msra.mxu0 %v517
        %530 = vmatmul.bf16.gmra.mxu0 %v513
        %v531 = vpop.f32.mrf.mxu0
        %v532 = vadd.f32 0.0, %v531
        %v533 = vpop.f32.mrf.mxu0
        %534 = vdwg.mxu0
        %535 = vmatpush.bf16.msra.mxu0 0
        %536 = vmatpush.bf16.msra.mxu0 0
        %537 = vmatpush.bf16.msra.mxu0 0
        %538 = vmatpush.bf16.msra.mxu0 0
        %539 = vmatpush.bf16.msra.mxu0 0
        %540 = vmatpush.bf16.msra.mxu0 0
        %541 = vmatpush.bf16.msra.mxu0 0
        %542 = vmatpush.bf16.msra.mxu0 %v520
        %543 = vmatmul.bf16.gmra.mxu0 %v513
        %v544 = vpop.f32.mrf.mxu0
        %v545 = vadd.f32 0.0, %v544
        %v546 = vpop.f32.mrf.mxu0
        %547 = vdwg.mxu0
        %v549 = vsel %vm511, %v508, 0
        %v552 = vsel %vm515, %v434, 0
        %v555 = vsel %vm515, %v435, 0
        %557 = vmatpush.bf16.msra.mxu0 0
        %558 = vmatpush.bf16.msra.mxu0 0
        %559 = vmatpush.bf16.msra.mxu0 0
        %560 = vmatpush.bf16.msra.mxu0 0
        %561 = vmatpush.bf16.msra.mxu0 0
        %562 = vmatpush.bf16.msra.mxu0 0
        %563 = vmatpush.bf16.msra.mxu0 0
        %564 = vmatpush.bf16.msra.mxu0 %v552
        %565 = vmatmul.bf16.gmra.mxu0 %v549
        %v566 = vpop.f32.mrf.mxu0
        %v567 = vadd.f32 %v532, %v566
        %v568 = vpop.f32.mrf.mxu0
        %569 = vdwg.mxu0
        %570 = vmatpush.bf16.msra.mxu0 0
        %571 = vmatpush.bf16.msra.mxu0 0
        %572 = vmatpush.bf16.msra.mxu0 0
        %573 = vmatpush.bf16.msra.mxu0 0
        %574 = vmatpush.bf16.msra.mxu0 0
        %575 = vmatpush.bf16.msra.mxu0 0
        %576 = vmatpush.bf16.msra.mxu0 0
        %577 = vmatpush.bf16.msra.mxu0 %v555
        %578 = vmatmul.bf16.gmra.mxu0 %v549
        %v579 = vpop.f32.mrf.mxu0
        %v580 = vadd.f32 %v545, %v579
        %v581 = vpop.f32.mrf.mxu0
        %582 = vdwg.mxu0
        %s583 = scalar_lea.vmem %s1, 8
        %v584 = vld [vmem:[%s583] sm:$0xf]
        %v586 = vsel %vm511, %v584, 0
        %v589 = vsel %vm515, %v456, 0
        %v592 = vsel %vm515, %v457, 0
        %594 = vmatpush.bf16.msra.mxu0 0
        %595 = vmatpush.bf16.msra.mxu0 0
        %596 = vmatpush.bf16.msra.mxu0 0
        %597 = vmatpush.bf16.msra.mxu0 0
        %598 = vmatpush.bf16.msra.mxu0 0
        %599 = vmatpush.bf16.msra.mxu0 0
        %600 = vmatpush.bf16.msra.mxu0 0
        %601 = vmatpush.bf16.msra.mxu0 %v589
        %602 = vmatmul.bf16.gmra.mxu0 %v586
        %v603 = vpop.f32.mrf.mxu0
        %v604 = vadd.f32 0.0, %v603
        %v605 = vpop.f32.mrf.mxu0
        %606 = vdwg.mxu0
        %607 = vmatpush.bf16.msra.mxu0 0
        %608 = vmatpush.bf16.msra.mxu0 0
        %609 = vmatpush.bf16.msra.mxu0 0
        %610 = vmatpush.bf16.msra.mxu0 0
        %611 = vmatpush.bf16.msra.mxu0 0
        %612 = vmatpush.bf16.msra.mxu0 0
        %613 = vmatpush.bf16.msra.mxu0 0
        %614 = vmatpush.bf16.msra.mxu0 %v592
        %615 = vmatmul.bf16.gmra.mxu0 %v586
        %v616 = vpop.f32.mrf.mxu0
        %v617 = vadd.f32 0.0, %v616
        %v618 = vpop.f32.mrf.mxu0
        %619 = vdwg.mxu0
        %v620 = vadd.f32 %v567, %v604
        %v621 = vadd.f32 %v580, %v617
        %s622 = scalar_lea.vmem %s1, 12
        %v623 = vld [vmem:[%s622] sm:$0xf]
        %v625 = vsel %vm511, %v623, 0
        %v628 = vsel %vm515, %v478, 0
        %v631 = vsel %vm515, %v479, 0
        %633 = vmatpush.bf16.msra.mxu0 0
        %634 = vmatpush.bf16.msra.mxu0 0
        %635 = vmatpush.bf16.msra.mxu0 0
        %636 = vmatpush.bf16.msra.mxu0 0
        %637 = vmatpush.bf16.msra.mxu0 0
        %638 = vmatpush.bf16.msra.mxu0 0
        %639 = vmatpush.bf16.msra.mxu0 0
        %640 = vmatpush.bf16.msra.mxu0 %v628
        %641 = vmatmul.bf16.gmra.mxu0 %v625
        %v642 = vpop.f32.mrf.mxu0
        %v643 = vadd.f32 0.0, %v642
        %v644 = vpop.f32.mrf.mxu0
        %645 = vdwg.mxu0
        %646 = vmatpush.bf16.msra.mxu0 0
        %647 = vmatpush.bf16.msra.mxu0 0
        %648 = vmatpush.bf16.msra.mxu0 0
        %649 = vmatpush.bf16.msra.mxu0 0
        %650 = vmatpush.bf16.msra.mxu0 0
        %651 = vmatpush.bf16.msra.mxu0 0
        %652 = vmatpush.bf16.msra.mxu0 0
        %653 = vmatpush.bf16.msra.mxu0 %v631
        %654 = vmatmul.bf16.gmra.mxu0 %v625
        %v655 = vpop.f32.mrf.mxu0
        %v656 = vadd.f32 0.0, %v655
        %v657 = vpop.f32.mrf.mxu0
        %658 = vdwg.mxu0
        %v659 = vadd.f32 %v620, %v643
        %v660 = vadd.f32 %v621, %v656
        %s661 = scalar_lea.vmem %s1, 16
        %v662 = vld [vmem:[%s661] sm:$0xf]
        %v664 = vsel %vm511, %v662, 0
        %v667 = vsel %vm515, %v320, 0
        %v670 = vsel %vm515, %v321, 0
        %672 = vmatpush.bf16.msra.mxu0 0
        %673 = vmatpush.bf16.msra.mxu0 0
        %674 = vmatpush.bf16.msra.mxu0 0
        %675 = vmatpush.bf16.msra.mxu0 0
        %676 = vmatpush.bf16.msra.mxu0 0
        %677 = vmatpush.bf16.msra.mxu0 0
        %678 = vmatpush.bf16.msra.mxu0 0
        %679 = vmatpush.bf16.msra.mxu0 %v667
        %680 = vmatmul.bf16.gmra.mxu0 %v664
        %v681 = vpop.f32.mrf.mxu0
        %v682 = vadd.f32 0.0, %v681
        %v683 = vpop.f32.mrf.mxu0
        %684 = vdwg.mxu0
        %685 = vmatpush.bf16.msra.mxu0 0
        %686 = vmatpush.bf16.msra.mxu0 0
        %687 = vmatpush.bf16.msra.mxu0 0
        %688 = vmatpush.bf16.msra.mxu0 0
        %689 = vmatpush.bf16.msra.mxu0 0
        %690 = vmatpush.bf16.msra.mxu0 0
        %691 = vmatpush.bf16.msra.mxu0 0
        %692 = vmatpush.bf16.msra.mxu0 %v670
        %693 = vmatmul.bf16.gmra.mxu0 %v664
        %v694 = vpop.f32.mrf.mxu0
        %v695 = vadd.f32 0.0, %v694
        %v696 = vpop.f32.mrf.mxu0
        %697 = vdwg.mxu0
        %v698 = vadd.f32 %v659, %v682
        %v699 = vadd.f32 %v660, %v695
        %s700 = scalar_lea.vmem %s1, 20
        %v701 = vld [vmem:[%s700] sm:$0xf]
        %v703 = vsel %vm511, %v701, 0
        %v706 = vsel %vm515, %v480, 0
        %v709 = vsel %vm515, %v481, 0
        %711 = vmatpush.bf16.msra.mxu0 0
        %712 = vmatpush.bf16.msra.mxu0 0
        %713 = vmatpush.bf16.msra.mxu0 0
        %714 = vmatpush.bf16.msra.mxu0 0
        %715 = vmatpush.bf16.msra.mxu0 0
        %716 = vmatpush.bf16.msra.mxu0 0
        %717 = vmatpush.bf16.msra.mxu0 0
        %718 = vmatpush.bf16.msra.mxu0 %v706
        %719 = vmatmul.bf16.gmra.mxu0 %v703
        %v720 = vpop.f32.mrf.mxu0
        %v721 = vadd.f32 0.0, %v720
        %v722 = vpop.f32.mrf.mxu0
        %723 = vdwg.mxu0
        %724 = vmatpush.bf16.msra.mxu0 0
        %725 = vmatpush.bf16.msra.mxu0 0
        %726 = vmatpush.bf16.msra.mxu0 0
        %727 = vmatpush.bf16.msra.mxu0 0
        %728 = vmatpush.bf16.msra.mxu0 0
        %729 = vmatpush.bf16.msra.mxu0 0
        %730 = vmatpush.bf16.msra.mxu0 0
        %731 = vmatpush.bf16.msra.mxu0 %v709
        %732 = vmatmul.bf16.gmra.mxu0 %v703
        %v733 = vpop.f32.mrf.mxu0
        %v734 = vadd.f32 0.0, %v733
        %v735 = vpop.f32.mrf.mxu0
        %736 = vdwg.mxu0
        %v737 = vadd.f32 %v698, %v721
        %v738 = vadd.f32 %v699, %v734
        %s739 = scalar_lea.vmem %s1, 24
        %v740 = vld [vmem:[%s739] sm:$0xf]
        %v742 = vsel %vm511, %v740, 0
        %v745 = vsel %vm515, %v504, 0
        %v748 = vsel %vm515, %v505, 0
        %750 = vmatpush.bf16.msra.mxu0 0
        %751 = vmatpush.bf16.msra.mxu0 0
        %752 = vmatpush.bf16.msra.mxu0 0
        %753 = vmatpush.bf16.msra.mxu0 0
        %754 = vmatpush.bf16.msra.mxu0 0
        %755 = vmatpush.bf16.msra.mxu0 0
        %756 = vmatpush.bf16.msra.mxu0 0
        %757 = vmatpush.bf16.msra.mxu0 %v745
        %758 = vmatmul.bf16.gmra.mxu0 %v742
        %v759 = vpop.f32.mrf.mxu0
        %v760 = vadd.f32 0.0, %v759
        %v761 = vpop.f32.mrf.mxu0
        %762 = vdwg.mxu0
        %763 = vmatpush.bf16.msra.mxu0 0
        %764 = vmatpush.bf16.msra.mxu0 0
        %765 = vmatpush.bf16.msra.mxu0 0
        %766 = vmatpush.bf16.msra.mxu0 0
        %767 = vmatpush.bf16.msra.mxu0 0
        %768 = vmatpush.bf16.msra.mxu0 0
        %769 = vmatpush.bf16.msra.mxu0 0
        %770 = vmatpush.bf16.msra.mxu0 %v748
        %771 = vmatmul.bf16.gmra.mxu0 %v742
        %v772 = vpop.f32.mrf.mxu0
        %v773 = vadd.f32 0.0, %v772
        %v774 = vpop.f32.mrf.mxu0
        %775 = vdwg.mxu0
        %v776 = vadd.f32 %v737, %v760
        %v777 = vadd.f32 %v738, %v773
        %s778 = scalar_lea.vmem %s1, 28
        %v779 = vld [vmem:[%s778] sm:$0xf]
        %v781 = vsel %vm511, %v779, 0
        %v784 = vsel %vm515, %v386, 0
        %v787 = vsel %vm515, %v387, 0
        %789 = vmatpush.bf16.msra.mxu0 0
        %790 = vmatpush.bf16.msra.mxu0 0
        %791 = vmatpush.bf16.msra.mxu0 0
        %792 = vmatpush.bf16.msra.mxu0 0
        %793 = vmatpush.bf16.msra.mxu0 0
        %794 = vmatpush.bf16.msra.mxu0 0
        %795 = vmatpush.bf16.msra.mxu0 0
        %796 = vmatpush.bf16.msra.mxu0 %v784
        %797 = vmatmul.bf16.gmra.mxu0 %v781
        %v798 = vpop.f32.mrf.mxu0
        %v799 = vadd.f32 0.0, %v798
        %v800 = vpop.f32.mrf.mxu0
        %801 = vdwg.mxu0
        %802 = vmatpush.bf16.msra.mxu0 0
        %803 = vmatpush.bf16.msra.mxu0 0
        %804 = vmatpush.bf16.msra.mxu0 0
        %805 = vmatpush.bf16.msra.mxu0 0
        %806 = vmatpush.bf16.msra.mxu0 0
        %807 = vmatpush.bf16.msra.mxu0 0
        %808 = vmatpush.bf16.msra.mxu0 0
        %809 = vmatpush.bf16.msra.mxu0 %v787
        %810 = vmatmul.bf16.gmra.mxu0 %v781
        %v811 = vpop.f32.mrf.mxu0
        %v812 = vadd.f32 0.0, %v811
        %v813 = vpop.f32.mrf.mxu0
        %814 = vdwg.mxu0
        %v815 = vadd.f32 %v776, %v799
        %v816 = vadd.f32 %v777, %v812
        %s817 = scalar_lea.vmem %s1, 32
        %v818 = vld [vmem:[%s817] sm:$0xf]
        %v820 = vsel %vm511, %v818, 0
        %v823 = vsel %vm515, %v506, 0
        %v826 = vsel %vm515, %v507, 0
        %828 = vmatpush.bf16.msra.mxu0 0
        %829 = vmatpush.bf16.msra.mxu0 0
        %830 = vmatpush.bf16.msra.mxu0 0
        %831 = vmatpush.bf16.msra.mxu0 0
        %832 = vmatpush.bf16.msra.mxu0 0
        %833 = vmatpush.bf16.msra.mxu0 0
        %834 = vmatpush.bf16.msra.mxu0 0
        %835 = vmatpush.bf16.msra.mxu0 %v823
        %836 = vmatmul.bf16.gmra.mxu0 %v820
        %v837 = vpop.f32.mrf.mxu0
        %v838 = vadd.f32 0.0, %v837
        %v839 = vpop.f32.mrf.mxu0
        %840 = vdwg.mxu0
        %841 = vmatpush.bf16.msra.mxu0 0
        %842 = vmatpush.bf16.msra.mxu0 0
        %843 = vmatpush.bf16.msra.mxu0 0
        %844 = vmatpush.bf16.msra.mxu0 0
        %845 = vmatpush.bf16.msra.mxu0 0
        %846 = vmatpush.bf16.msra.mxu0 0
        %847 = vmatpush.bf16.msra.mxu0 0
        %848 = vmatpush.bf16.msra.mxu0 %v826
        %849 = vmatmul.bf16.gmra.mxu0 %v820
        %v850 = vpop.f32.mrf.mxu0
        %v851 = vadd.f32 0.0, %v850
        %v852 = vpop.f32.mrf.mxu0
        %853 = vdwg.mxu0
        %v854 = vadd.f32 %v815, %v838
        %v855 = vadd.f32 %v816, %v851
        %v856 = vld [vmem:[%s2] sm:$0xff]
        %858 = vset.pattern.permute.xlu0 0
        %859 = vperm.xlu0 %858, %v856
        %v860 = vpop.permute.xlu0 %859
        %v862 = vadd.f32 %v854, %v860
        %v863 = vadd.f32 %v855, %v860
        %vm864 = vcmp.ge.f32.partialorder %v862, 0.0
        %vm865 = vcmp.ge.f32.partialorder %v863, 0.0
        %v866 = vmul.f32 %v862, 0.1
        %v867 = vmul.f32 %v863, 0.1
        %v868 = vsel %vm864, %v862, %v866
        %v869 = vsel %vm865, %v863, %v867
        %v870 = vpack.c.bf16 %v869, %v868
        %v872 = vunpack.c.l.b16 %v870
        %v873 = vunpack.c.h.b16 %v870
        %v874 = vpack.c.b16 %v872, %v872
        %v875 = vpack.c.b16 %v873, %v873
        %876 = vrot.lane.b32.xlu0 %v874, 112
        %v877 = vpop.permute.xlu0 %876
        %878 = vrot.lane.b32.xlu0 %v875, 112
        %v879 = vpop.permute.xlu0 %878
        %v880 = vsel %vm326, %v877, %v879
        %v884 = vsel %vm329, %v879, %v877
        %886 = vrot.lane.b32.xlu0 %v875, 16
        %v887 = vpop.permute.xlu0 %886
        %888 = vrot.lane.b32.xlu0 %v874, 16
        %v889 = vpop.permute.xlu0 %888
        %v890 = vsel %vm338, %v889, %v887
        %v894 = vsel %vm341, %v887, %v889
        %v896 = vsel %vm356, %v880, %v894
        %v897 = vsel %vm363, %v884, %v890
        %v898 = vsel %vm378, %v894, %v880
        %v899 = vsel %vm385, %v890, %v884
        %902 = vrot.lane.b32.xlu0 %v896, 127
        %v903 = vpop.permute.xlu0 %902
        %904 = vrot.lane.b32.xlu0 %v897, 127
        %v905 = vpop.permute.xlu0 %904
        %v906 = vsel %vm396, %v903, %v905
        %v910 = vsel %vm399, %v905, %v903
        %912 = vrot.lane.b32.xlu0 %v897, 1
        %v913 = vpop.permute.xlu0 %912
        %914 = vrot.lane.b32.xlu0 %v896, 1
        %v915 = vpop.permute.xlu0 %914
        %v916 = vsel %vm408, %v915, %v913
        %v920 = vsel %vm411, %v913, %v915
        %v922 = vsel %vm426, %v906, %v920
        %v923 = vsel %vm433, %v910, %v916
        %v924 = vsel %vm448, %v920, %v906
        %v925 = vsel %vm455, %v916, %v910
        %926 = vrot.lane.b32.xlu0 %v874, 127
        %v927 = vpop.permute.xlu0 %926
        %928 = vrot.lane.b32.xlu0 %v875, 127
        %v929 = vpop.permute.xlu0 %928
        %v930 = vsel %vm396, %v927, %v929
        %v934 = vsel %vm399, %v929, %v927
        %936 = vrot.lane.b32.xlu0 %v875, 1
        %v937 = vpop.permute.xlu0 %936
        %938 = vrot.lane.b32.xlu0 %v874, 1
        %v939 = vpop.permute.xlu0 %938
        %v940 = vsel %vm408, %v939, %v937
        %v944 = vsel %vm411, %v937, %v939
        %v946 = vsel %vm426, %v930, %v944
        %v947 = vsel %vm433, %v934, %v940
        %v948 = vsel %vm448, %v944, %v930
        %v949 = vsel %vm455, %v940, %v934
        %952 = vrot.lane.b32.xlu0 %v898, 127
        %v953 = vpop.permute.xlu0 %952
        %954 = vrot.lane.b32.xlu0 %v899, 127
        %v955 = vpop.permute.xlu0 %954
        %v956 = vsel %vm396, %v953, %v955
        %v960 = vsel %vm399, %v955, %v953
        %962 = vrot.lane.b32.xlu0 %v899, 1
        %v963 = vpop.permute.xlu0 %962
        %964 = vrot.lane.b32.xlu0 %v898, 1
        %v965 = vpop.permute.xlu0 %964
        %v966 = vsel %vm408, %v965, %v963
        %v970 = vsel %vm411, %v963, %v965
        %v972 = vsel %vm426, %v956, %v970
        %v973 = vsel %vm433, %v960, %v966
        %v974 = vsel %vm448, %v970, %v956
        %v975 = vsel %vm455, %v966, %v960
        %v976 = vld [vmem:[%s3] sm:$0xf]
        %s977 = scalar_lea.vmem %s3, 4
        %v978 = vld [vmem:[%s977] sm:$0xf]
        %vm979 = vcmask 64512
        %v981 = vsel %vm979, %v978, 0
        %vm983 = vcmask 1043456
        %v985 = vsel %vm983, %v896, 0
        %v988 = vsel %vm983, %v897, 0
        %990 = vmatpush.bf16.msra.mxu0 0
        %991 = vmatpush.bf16.msra.mxu0 0
        %992 = vmatpush.bf16.msra.mxu0 0
        %993 = vmatpush.bf16.msra.mxu0 0
        %994 = vmatpush.bf16.msra.mxu0 0
        %995 = vmatpush.bf16.msra.mxu0 0
        %996 = vmatpush.bf16.msra.mxu0 0
        %997 = vmatpush.bf16.msra.mxu0 %v985
        %998 = vmatmul.bf16.gmra.mxu0 %v981
        %v999 = vpop.f32.mrf.mxu0
        %v1000 = vadd.f32 0.0, %v999
        %v1001 = vpop.f32.mrf.mxu0
        %1002 = vdwg.mxu0
        %1003 = vmatpush.bf16.msra.mxu0 0
        %1004 = vmatpush.bf16.msra.mxu0 0
        %1005 = vmatpush.bf16.msra.mxu0 0
        %1006 = vmatpush.bf16.msra.mxu0 0
        %1007 = vmatpush.bf16.msra.mxu0 0
        %1008 = vmatpush.bf16.msra.mxu0 0
        %1009 = vmatpush.bf16.msra.mxu0 0
        %1010 = vmatpush.bf16.msra.mxu0 %v988
        %1011 = vmatmul.bf16.gmra.mxu0 %v981
        %v1012 = vpop.f32.mrf.mxu0
        %v1013 = vadd.f32 0.0, %v1012
        %v1014 = vpop.f32.mrf.mxu0
        %1015 = vdwg.mxu0
        %v1017 = vsel %vm979, %v976, 0
        %v1020 = vsel %vm983, %v922, 0
        %v1023 = vsel %vm983, %v923, 0
        %1025 = vmatpush.bf16.msra.mxu0 0
        %1026 = vmatpush.bf16.msra.mxu0 0
        %1027 = vmatpush.bf16.msra.mxu0 0
        %1028 = vmatpush.bf16.msra.mxu0 0
        %1029 = vmatpush.bf16.msra.mxu0 0
        %1030 = vmatpush.bf16.msra.mxu0 0
        %1031 = vmatpush.bf16.msra.mxu0 0
        %1032 = vmatpush.bf16.msra.mxu0 %v1020
        %1033 = vmatmul.bf16.gmra.mxu0 %v1017
        %v1034 = vpop.f32.mrf.mxu0
        %v1035 = vadd.f32 %v1000, %v1034
        %v1036 = vpop.f32.mrf.mxu0
        %1037 = vdwg.mxu0
        %1038 = vmatpush.bf16.msra.mxu0 0
        %1039 = vmatpush.bf16.msra.mxu0 0
        %1040 = vmatpush.bf16.msra.mxu0 0
        %1041 = vmatpush.bf16.msra.mxu0 0
        %1042 = vmatpush.bf16.msra.mxu0 0
        %1043 = vmatpush.bf16.msra.mxu0 0
        %1044 = vmatpush.bf16.msra.mxu0 0
        %1045 = vmatpush.bf16.msra.mxu0 %v1023
        %1046 = vmatmul.bf16.gmra.mxu0 %v1017
        %v1047 = vpop.f32.mrf.mxu0
        %v1048 = vadd.f32 %v1013, %v1047
        %v1049 = vpop.f32.mrf.mxu0
        %1050 = vdwg.mxu0
        %s1051 = scalar_lea.vmem %s3, 8
        %v1052 = vld [vmem:[%s1051] sm:$0xf]
        %v1054 = vsel %vm979, %v1052, 0
        %v1057 = vsel %vm983, %v924, 0
        %v1060 = vsel %vm983, %v925, 0
        %1062 = vmatpush.bf16.msra.mxu0 0
        %1063 = vmatpush.bf16.msra.mxu0 0
        %1064 = vmatpush.bf16.msra.mxu0 0
        %1065 = vmatpush.bf16.msra.mxu0 0
        %1066 = vmatpush.bf16.msra.mxu0 0
        %1067 = vmatpush.bf16.msra.mxu0 0
        %1068 = vmatpush.bf16.msra.mxu0 0
        %1069 = vmatpush.bf16.msra.mxu0 %v1057
        %1070 = vmatmul.bf16.gmra.mxu0 %v1054
        %v1071 = vpop.f32.mrf.mxu0
        %v1072 = vadd.f32 0.0, %v1071
        %v1073 = vpop.f32.mrf.mxu0
        %1074 = vdwg.mxu0
        %1075 = vmatpush.bf16.msra.mxu0 0
        %1076 = vmatpush.bf16.msra.mxu0 0
        %1077 = vmatpush.bf16.msra.mxu0 0
        %1078 = vmatpush.bf16.msra.mxu0 0
        %1079 = vmatpush.bf16.msra.mxu0 0
        %1080 = vmatpush.bf16.msra.mxu0 0
        %1081 = vmatpush.bf16.msra.mxu0 0
        %1082 = vmatpush.bf16.msra.mxu0 %v1060
        %1083 = vmatmul.bf16.gmra.mxu0 %v1054
        %v1084 = vpop.f32.mrf.mxu0
        %v1085 = vadd.f32 0.0, %v1084
        %v1086 = vpop.f32.mrf.mxu0
        %1087 = vdwg.mxu0
        %v1088 = vadd.f32 %v1035, %v1072
        %v1089 = vadd.f32 %v1048, %v1085
        %s1090 = scalar_lea.vmem %s3, 12
        %v1091 = vld [vmem:[%s1090] sm:$0xf]
        %v1093 = vsel %vm979, %v1091, 0
        %v1096 = vsel %vm983, %v946, 0
        %v1099 = vsel %vm983, %v947, 0
        %1101 = vmatpush.bf16.msra.mxu0 0
        %1102 = vmatpush.bf16.msra.mxu0 0
        %1103 = vmatpush.bf16.msra.mxu0 0
        %1104 = vmatpush.bf16.msra.mxu0 0
        %1105 = vmatpush.bf16.msra.mxu0 0
        %1106 = vmatpush.bf16.msra.mxu0 0
        %1107 = vmatpush.bf16.msra.mxu0 0
        %1108 = vmatpush.bf16.msra.mxu0 %v1096
        %1109 = vmatmul.bf16.gmra.mxu0 %v1093
        %v1110 = vpop.f32.mrf.mxu0
        %v1111 = vadd.f32 0.0, %v1110
        %v1112 = vpop.f32.mrf.mxu0
        %1113 = vdwg.mxu0
        %1114 = vmatpush.bf16.msra.mxu0 0
        %1115 = vmatpush.bf16.msra.mxu0 0
        %1116 = vmatpush.bf16.msra.mxu0 0
        %1117 = vmatpush.bf16.msra.mxu0 0
        %1118 = vmatpush.bf16.msra.mxu0 0
        %1119 = vmatpush.bf16.msra.mxu0 0
        %1120 = vmatpush.bf16.msra.mxu0 0
        %1121 = vmatpush.bf16.msra.mxu0 %v1099
        %1122 = vmatmul.bf16.gmra.mxu0 %v1093
        %v1123 = vpop.f32.mrf.mxu0
        %v1124 = vadd.f32 0.0, %v1123
        %v1125 = vpop.f32.mrf.mxu0
        %1126 = vdwg.mxu0
        %v1127 = vadd.f32 %v1088, %v1111
        %v1128 = vadd.f32 %v1089, %v1124
        %s1129 = scalar_lea.vmem %s3, 16
        %v1130 = vld [vmem:[%s1129] sm:$0xf]
        %v1132 = vsel %vm979, %v1130, 0
        %v1135 = vsel %vm983, %v874, 0
        %v1138 = vsel %vm983, %v875, 0
        %1140 = vmatpush.bf16.msra.mxu0 0
        %1141 = vmatpush.bf16.msra.mxu0 0
        %1142 = vmatpush.bf16.msra.mxu0 0
        %1143 = vmatpush.bf16.msra.mxu0 0
        %1144 = vmatpush.bf16.msra.mxu0 0
        %1145 = vmatpush.bf16.msra.mxu0 0
        %1146 = vmatpush.bf16.msra.mxu0 0
        %1147 = vmatpush.bf16.msra.mxu0 %v1135
        %1148 = vmatmul.bf16.gmra.mxu0 %v1132
        %v1149 = vpop.f32.mrf.mxu0
        %v1150 = vadd.f32 0.0, %v1149
        %v1151 = vpop.f32.mrf.mxu0
        %1152 = vdwg.mxu0
        %1153 = vmatpush.bf16.msra.mxu0 0
        %1154 = vmatpush.bf16.msra.mxu0 0
        %1155 = vmatpush.bf16.msra.mxu0 0
        %1156 = vmatpush.bf16.msra.mxu0 0
        %1157 = vmatpush.bf16.msra.mxu0 0
        %1158 = vmatpush.bf16.msra.mxu0 0
        %1159 = vmatpush.bf16.msra.mxu0 0
        %1160 = vmatpush.bf16.msra.mxu0 %v1138
        %1161 = vmatmul.bf16.gmra.mxu0 %v1132
        %v1162 = vpop.f32.mrf.mxu0
        %v1163 = vadd.f32 0.0, %v1162
        %v1164 = vpop.f32.mrf.mxu0
        %1165 = vdwg.mxu0
        %v1166 = vadd.f32 %v1127, %v1150
        %v1167 = vadd.f32 %v1128, %v1163
        %s1168 = scalar_lea.vmem %s3, 20
        %v1169 = vld [vmem:[%s1168] sm:$0xf]
        %v1171 = vsel %vm979, %v1169, 0
        %v1174 = vsel %vm983, %v948, 0
        %v1177 = vsel %vm983, %v949, 0
        %1179 = vmatpush.bf16.msra.mxu0 0
        %1180 = vmatpush.bf16.msra.mxu0 0
        %1181 = vmatpush.bf16.msra.mxu0 0
        %1182 = vmatpush.bf16.msra.mxu0 0
        %1183 = vmatpush.bf16.msra.mxu0 0
        %1184 = vmatpush.bf16.msra.mxu0 0
        %1185 = vmatpush.bf16.msra.mxu0 0
        %1186 = vmatpush.bf16.msra.mxu0 %v1174
        %1187 = vmatmul.bf16.gmra.mxu0 %v1171
        %v1188 = vpop.f32.mrf.mxu0
        %v1189 = vadd.f32 0.0, %v1188
        %v1190 = vpop.f32.mrf.mxu0
        %1191 = vdwg.mxu0
        %1192 = vmatpush.bf16.msra.mxu0 0
        %1193 = vmatpush.bf16.msra.mxu0 0
        %1194 = vmatpush.bf16.msra.mxu0 0
        %1195 = vmatpush.bf16.msra.mxu0 0
        %1196 = vmatpush.bf16.msra.mxu0 0
        %1197 = vmatpush.bf16.msra.mxu0 0
        %1198 = vmatpush.bf16.msra.mxu0 0
        %1199 = vmatpush.bf16.msra.mxu0 %v1177
        %1200 = vmatmul.bf16.gmra.mxu0 %v1171
        %v1201 = vpop.f32.mrf.mxu0
        %v1202 = vadd.f32 0.0, %v1201
        %v1203 = vpop.f32.mrf.mxu0
        %1204 = vdwg.mxu0
        %v1205 = vadd.f32 %v1166, %v1189
        %v1206 = vadd.f32 %v1167, %v1202
        %s1207 = scalar_lea.vmem %s3, 24
        %v1208 = vld [vmem:[%s1207] sm:$0xf]
        %v1210 = vsel %vm979, %v1208, 0
        %v1213 = vsel %vm983, %v972, 0
        %v1216 = vsel %vm983, %v973, 0
        %1218 = vmatpush.bf16.msra.mxu0 0
        %1219 = vmatpush.bf16.msra.mxu0 0
        %1220 = vmatpush.bf16.msra.mxu0 0
        %1221 = vmatpush.bf16.msra.mxu0 0
        %1222 = vmatpush.bf16.msra.mxu0 0
        %1223 = vmatpush.bf16.msra.mxu0 0
        %1224 = vmatpush.bf16.msra.mxu0 0
        %1225 = vmatpush.bf16.msra.mxu0 %v1213
        %1226 = vmatmul.bf16.gmra.mxu0 %v1210
        %v1227 = vpop.f32.mrf.mxu0
        %v1228 = vadd.f32 0.0, %v1227
        %v1229 = vpop.f32.mrf.mxu0
        %1230 = vdwg.mxu0
        %1231 = vmatpush.bf16.msra.mxu0 0
        %1232 = vmatpush.bf16.msra.mxu0 0
        %1233 = vmatpush.bf16.msra.mxu0 0
        %1234 = vmatpush.bf16.msra.mxu0 0
        %1235 = vmatpush.bf16.msra.mxu0 0
        %1236 = vmatpush.bf16.msra.mxu0 0
        %1237 = vmatpush.bf16.msra.mxu0 0
        %1238 = vmatpush.bf16.msra.mxu0 %v1216
        %1239 = vmatmul.bf16.gmra.mxu0 %v1210
        %v1240 = vpop.f32.mrf.mxu0
        %v1241 = vadd.f32 0.0, %v1240
        %v1242 = vpop.f32.mrf.mxu0
        %1243 = vdwg.mxu0
        %v1244 = vadd.f32 %v1205, %v1228
        %v1245 = vadd.f32 %v1206, %v1241
        %s1246 = scalar_lea.vmem %s3, 28
        %v1247 = vld [vmem:[%s1246] sm:$0xf]
        %v1249 = vsel %vm979, %v1247, 0
        %v1252 = vsel %vm983, %v898, 0
        %v1255 = vsel %vm983, %v899, 0
        %1257 = vmatpush.bf16.msra.mxu0 0
        %1258 = vmatpush.bf16.msra.mxu0 0
        %1259 = vmatpush.bf16.msra.mxu0 0
        %1260 = vmatpush.bf16.msra.mxu0 0
        %1261 = vmatpush.bf16.msra.mxu0 0
        %1262 = vmatpush.bf16.msra.mxu0 0
        %1263 = vmatpush.bf16.msra.mxu0 0
        %1264 = vmatpush.bf16.msra.mxu0 %v1252
        %1265 = vmatmul.bf16.gmra.mxu0 %v1249
        %v1266 = vpop.f32.mrf.mxu0
        %v1267 = vadd.f32 0.0, %v1266
        %v1268 = vpop.f32.mrf.mxu0
        %1269 = vdwg.mxu0
        %1270 = vmatpush.bf16.msra.mxu0 0
        %1271 = vmatpush.bf16.msra.mxu0 0
        %1272 = vmatpush.bf16.msra.mxu0 0
        %1273 = vmatpush.bf16.msra.mxu0 0
        %1274 = vmatpush.bf16.msra.mxu0 0
        %1275 = vmatpush.bf16.msra.mxu0 0
        %1276 = vmatpush.bf16.msra.mxu0 0
        %1277 = vmatpush.bf16.msra.mxu0 %v1255
        %1278 = vmatmul.bf16.gmra.mxu0 %v1249
        %v1279 = vpop.f32.mrf.mxu0
        %v1280 = vadd.f32 0.0, %v1279
        %v1281 = vpop.f32.mrf.mxu0
        %1282 = vdwg.mxu0
        %v1283 = vadd.f32 %v1244, %v1267
        %v1284 = vadd.f32 %v1245, %v1280
        %s1285 = scalar_lea.vmem %s3, 32
        %v1286 = vld [vmem:[%s1285] sm:$0xf]
        %v1288 = vsel %vm979, %v1286, 0
        %v1291 = vsel %vm983, %v974, 0
        %v1294 = vsel %vm983, %v975, 0
        %1296 = vmatpush.bf16.msra.mxu0 0
        %1297 = vmatpush.bf16.msra.mxu0 0
        %1298 = vmatpush.bf16.msra.mxu0 0
        %1299 = vmatpush.bf16.msra.mxu0 0
        %1300 = vmatpush.bf16.msra.mxu0 0
        %1301 = vmatpush.bf16.msra.mxu0 0
        %1302 = vmatpush.bf16.msra.mxu0 0
        %1303 = vmatpush.bf16.msra.mxu0 %v1291
        %1304 = vmatmul.bf16.gmra.mxu0 %v1288
        %v1305 = vpop.f32.mrf.mxu0
        %v1306 = vadd.f32 0.0, %v1305
        %v1307 = vpop.f32.mrf.mxu0
        %1308 = vdwg.mxu0
        %1309 = vmatpush.bf16.msra.mxu0 0
        %1310 = vmatpush.bf16.msra.mxu0 0
        %1311 = vmatpush.bf16.msra.mxu0 0
        %1312 = vmatpush.bf16.msra.mxu0 0
        %1313 = vmatpush.bf16.msra.mxu0 0
        %1314 = vmatpush.bf16.msra.mxu0 0
        %1315 = vmatpush.bf16.msra.mxu0 0
        %1316 = vmatpush.bf16.msra.mxu0 %v1294
        %1317 = vmatmul.bf16.gmra.mxu0 %v1288
        %v1318 = vpop.f32.mrf.mxu0
        %v1319 = vadd.f32 0.0, %v1318
        %v1320 = vpop.f32.mrf.mxu0
        %1321 = vdwg.mxu0
        %v1322 = vadd.f32 %v1283, %v1306
        %v1323 = vadd.f32 %v1284, %v1319
        %v1324 = vld [vmem:[%s4] sm:$0xff]
        %1326 = vset.pattern.permute.xlu0 0
        %1327 = vperm.xlu0 %1326, %v1324
        %v1328 = vpop.permute.xlu0 %1327
        %v1330 = vadd.f32 %v1322, %v1328
        %v1331 = vadd.f32 %v1323, %v1328
        %vm1332 = vcmp.ge.f32.partialorder %v1330, 0.0
        %vm1333 = vcmp.ge.f32.partialorder %v1331, 0.0
        %v1334 = vmul.f32 %v1330, 0.1
        %v1335 = vmul.f32 %v1331, 0.1
        %v1336 = vsel %vm1332, %v1330, %v1334
        %v1337 = vsel %vm1333, %v1331, %v1335
        %v1338 = vadd.f32 %v1336, %v868
        %v1339 = vadd.f32 %v1337, %v869
        %v1340 = vpack.c.bf16 %v1339, %v1338
        %v1342 = vunpack.c.l.b16 %v1340
        %v1343 = vunpack.c.h.b16 %v1340
        %v1344 = vpack.c.b16 %v1342, %v1342
        %v1345 = vpack.c.b16 %v1343, %v1343
        %1346 = vrot.lane.b32.xlu0 %v1344, 127
        %v1347 = vpop.permute.xlu0 %1346
        %1348 = vrot.lane.b32.xlu0 %v1345, 127
        %v1349 = vpop.permute.xlu0 %1348
        %v1350 = vsel %vm396, %v1347, %v1349
        %v1354 = vsel %vm399, %v1349, %v1347
        %v1356 = vsel %vm448, 0, %v1350
        %v1357 = vsel %vm455, 0, %v1354
        %1358 = vrot.lane.b32.xlu0 %v1344, 112
        %v1359 = vpop.permute.xlu0 %1358
        %1360 = vrot.lane.b32.xlu0 %v1345, 112
        %v1361 = vpop.permute.xlu0 %1360
        %v1362 = vsel %vm326, %v1359, %v1361
        %v1366 = vsel %vm329, %v1361, %v1359
        %v1368 = vsel %vm378, 0, %v1362
        %v1369 = vsel %vm385, 0, %v1366
        %1372 = vrot.lane.b32.xlu0 %v1368, 127
        %v1373 = vpop.permute.xlu0 %1372
        %1374 = vrot.lane.b32.xlu0 %v1369, 127
        %v1375 = vpop.permute.xlu0 %1374
        %v1376 = vsel %vm396, %v1373, %v1375
        %v1380 = vsel %vm399, %v1375, %v1373
        %v1382 = vsel %vm448, 0, %v1376
        %v1383 = vsel %vm455, 0, %v1380
        %v1384 = vld [vmem:[%s6] sm:$0xff]
        %s1385 = scalar_lea.vmem %s5, 16
        %v1386 = vld [vmem:[%s1385] sm:$0xf]
        %1388 = vset.pattern.permute.xlu0 0
        %1389 = vperm.xlu0 %1388, %v1384
        %v1390 = vpop.permute.xlu0 %1389
        %v1393 = vsel %vm979, %v1386, 0
        %v1396 = vsel %vm983, %v1344, 0
        %v1399 = vsel %vm983, %v1345, 0
        %1401 = vmatpush.bf16.msra.mxu0 0
        %1402 = vmatpush.bf16.msra.mxu0 0
        %1403 = vmatpush.bf16.msra.mxu0 0
        %1404 = vmatpush.bf16.msra.mxu0 0
        %1405 = vmatpush.bf16.msra.mxu0 0
        %1406 = vmatpush.bf16.msra.mxu0 0
        %1407 = vmatpush.bf16.msra.mxu0 0
        %1408 = vmatpush.bf16.msra.mxu0 %v1396
        %1409 = vmatmul.bf16.gmra.mxu0 %v1393
        %v1410 = vpop.f32.mrf.mxu0
        %v1411 = vadd.f32 %v1390, %v1410
        %v1412 = vpop.f32.mrf.mxu0
        %1413 = vdwg.mxu0
        %1414 = vmatpush.bf16.msra.mxu0 0
        %1415 = vmatpush.bf16.msra.mxu0 0
        %1416 = vmatpush.bf16.msra.mxu0 0
        %1417 = vmatpush.bf16.msra.mxu0 0
        %1418 = vmatpush.bf16.msra.mxu0 0
        %1419 = vmatpush.bf16.msra.mxu0 0
        %1420 = vmatpush.bf16.msra.mxu0 0
        %1421 = vmatpush.bf16.msra.mxu0 %v1399
        %1422 = vmatmul.bf16.gmra.mxu0 %v1393
        %v1423 = vpop.f32.mrf.mxu0
        %v1424 = vadd.f32 %v1390, %v1423
        %v1425 = vpop.f32.mrf.mxu0
        %1426 = vdwg.mxu0
        %s1427 = scalar_lea.vmem %s5, 20
        %v1428 = vld [vmem:[%s1427] sm:$0xf]
        %s1429 = scalar_lea.vmem %s5, 12
        %v1430 = vld [vmem:[%s1429] sm:$0xf]
        %v1432 = vsel %vm979, %v1430, 0
        %v1435 = vsel %vm983, %v1356, 0
        %v1438 = vsel %vm983, %v1357, 0
        %1440 = vmatpush.bf16.msra.mxu0 0
        %1441 = vmatpush.bf16.msra.mxu0 0
        %1442 = vmatpush.bf16.msra.mxu0 0
        %1443 = vmatpush.bf16.msra.mxu0 0
        %1444 = vmatpush.bf16.msra.mxu0 0
        %1445 = vmatpush.bf16.msra.mxu0 0
        %1446 = vmatpush.bf16.msra.mxu0 0
        %1447 = vmatpush.bf16.msra.mxu0 %v1435
        %1448 = vmatmul.bf16.gmra.mxu0 %v1432
        %v1449 = vpop.f32.mrf.mxu0
        %v1450 = vadd.f32 0.0, %v1449
        %v1451 = vpop.f32.mrf.mxu0
        %1452 = vdwg.mxu0
        %1453 = vmatpush.bf16.msra.mxu0 0
        %1454 = vmatpush.bf16.msra.mxu0 0
        %1455 = vmatpush.bf16.msra.mxu0 0
        %1456 = vmatpush.bf16.msra.mxu0 0
        %1457 = vmatpush.bf16.msra.mxu0 0
        %1458 = vmatpush.bf16.msra.mxu0 0
        %1459 = vmatpush.bf16.msra.mxu0 0
        %1460 = vmatpush.bf16.msra.mxu0 %v1438
        %1461 = vmatmul.bf16.gmra.mxu0 %v1432
        %v1462 = vpop.f32.mrf.mxu0
        %v1463 = vadd.f32 0.0, %v1462
        %v1464 = vpop.f32.mrf.mxu0
        %1465 = vdwg.mxu0
        %v1467 = vsel %vm979, %v1428, 0
        %1469 = vmatpush.bf16.msra.mxu0 0
        %1470 = vmatpush.bf16.msra.mxu0 0
        %1471 = vmatpush.bf16.msra.mxu0 0
        %1472 = vmatpush.bf16.msra.mxu0 0
        %1473 = vmatpush.bf16.msra.mxu0 0
        %1474 = vmatpush.bf16.msra.mxu0 0
        %1475 = vmatpush.bf16.msra.mxu0 0
        %1476 = vmatpush.bf16.msra.mxu0 %v1396
        %1477 = vmatmul.bf16.gmra.mxu0 %v1467
        %v1478 = vpop.f32.mrf.mxu0
        %v1479 = vadd.f32 %v1450, %v1478
        %v1480 = vpop.f32.mrf.mxu0
        %1481 = vdwg.mxu0
        %1482 = vmatpush.bf16.msra.mxu0 0
        %1483 = vmatpush.bf16.msra.mxu0 0
        %1484 = vmatpush.bf16.msra.mxu0 0
        %1485 = vmatpush.bf16.msra.mxu0 0
        %1486 = vmatpush.bf16.msra.mxu0 0
        %1487 = vmatpush.bf16.msra.mxu0 0
        %1488 = vmatpush.bf16.msra.mxu0 0
        %1489 = vmatpush.bf16.msra.mxu0 %v1399
        %1490 = vmatmul.bf16.gmra.mxu0 %v1467
        %v1491 = vpop.f32.mrf.mxu0
        %v1492 = vadd.f32 %v1463, %v1491
        %v1493 = vpop.f32.mrf.mxu0
        %1494 = vdwg.mxu0
        %v1495 = vadd.f32 %v1479, %v1390
        %v1496 = vadd.f32 %v1492, %v1390
        %s1497 = scalar_lea.vmem %s5, 28
        %v1498 = vld [vmem:[%s1497] sm:$0xf]
        %s1499 = scalar_lea.vmem %s5, 4
        %v1500 = vld [vmem:[%s1499] sm:$0xf]
        %v1502 = vsel %vm979, %v1500, 0
        %v1505 = vsel %vm983, %v1368, 0
        %v1508 = vsel %vm983, %v1369, 0
        %1510 = vmatpush.bf16.msra.mxu0 0
        %1511 = vmatpush.bf16.msra.mxu0 0
        %1512 = vmatpush.bf16.msra.mxu0 0
        %1513 = vmatpush.bf16.msra.mxu0 0
        %1514 = vmatpush.bf16.msra.mxu0 0
        %1515 = vmatpush.bf16.msra.mxu0 0
        %1516 = vmatpush.bf16.msra.mxu0 0
        %1517 = vmatpush.bf16.msra.mxu0 %v1505
        %1518 = vmatmul.bf16.gmra.mxu0 %v1502
        %v1519 = vpop.f32.mrf.mxu0
        %v1520 = vadd.f32 0.0, %v1519
        %v1521 = vpop.f32.mrf.mxu0
        %1522 = vdwg.mxu0
        %1523 = vmatpush.bf16.msra.mxu0 0
        %1524 = vmatpush.bf16.msra.mxu0 0
        %1525 = vmatpush.bf16.msra.mxu0 0
        %1526 = vmatpush.bf16.msra.mxu0 0
        %1527 = vmatpush.bf16.msra.mxu0 0
        %1528 = vmatpush.bf16.msra.mxu0 0
        %1529 = vmatpush.bf16.msra.mxu0 0
        %1530 = vmatpush.bf16.msra.mxu0 %v1508
        %1531 = vmatmul.bf16.gmra.mxu0 %v1502
        %v1532 = vpop.f32.mrf.mxu0
        %v1533 = vadd.f32 0.0, %v1532
        %v1534 = vpop.f32.mrf.mxu0
        %1535 = vdwg.mxu0
        %v1537 = vsel %vm979, %v1498, 0
        %1539 = vmatpush.bf16.msra.mxu0 0
        %1540 = vmatpush.bf16.msra.mxu0 0
        %1541 = vmatpush.bf16.msra.mxu0 0
        %1542 = vmatpush.bf16.msra.mxu0 0
        %1543 = vmatpush.bf16.msra.mxu0 0
        %1544 = vmatpush.bf16.msra.mxu0 0
        %1545 = vmatpush.bf16.msra.mxu0 0
        %1546 = vmatpush.bf16.msra.mxu0 %v1396
        %1547 = vmatmul.bf16.gmra.mxu0 %v1537
        %v1548 = vpop.f32.mrf.mxu0
        %v1549 = vadd.f32 %v1520, %v1548
        %v1550 = vpop.f32.mrf.mxu0
        %1551 = vdwg.mxu0
        %1552 = vmatpush.bf16.msra.mxu0 0
        %1553 = vmatpush.bf16.msra.mxu0 0
        %1554 = vmatpush.bf16.msra.mxu0 0
        %1555 = vmatpush.bf16.msra.mxu0 0
        %1556 = vmatpush.bf16.msra.mxu0 0
        %1557 = vmatpush.bf16.msra.mxu0 0
        %1558 = vmatpush.bf16.msra.mxu0 0
        %1559 = vmatpush.bf16.msra.mxu0 %v1399
        %1560 = vmatmul.bf16.gmra.mxu0 %v1537
        %v1561 = vpop.f32.mrf.mxu0
        %v1562 = vadd.f32 %v1533, %v1561
        %v1563 = vpop.f32.mrf.mxu0
        %1564 = vdwg.mxu0
        %v1565 = vadd.f32 %v1549, %v1390
        %v1566 = vadd.f32 %v1562, %v1390
        %s1567 = scalar_lea.vmem %s5, 32
        %v1568 = vld [vmem:[%s1567] sm:$0xf]
        %s1569 = scalar_lea.vmem %s5, 24
        %v1570 = vld [vmem:[%s1569] sm:$0xf]
        %v1572 = vsel %vm979, %v1570, 0
        %1574 = vmatpush.bf16.msra.mxu0 0
        %1575 = vmatpush.bf16.msra.mxu0 0
        %1576 = vmatpush.bf16.msra.mxu0 0
        %1577 = vmatpush.bf16.msra.mxu0 0
        %1578 = vmatpush.bf16.msra.mxu0 0
        %1579 = vmatpush.bf16.msra.mxu0 0
        %1580 = vmatpush.bf16.msra.mxu0 0
        %1581 = vmatpush.bf16.msra.mxu0 %v1435
        %1582 = vmatmul.bf16.gmra.mxu0 %v1572
        %v1583 = vpop.f32.mrf.mxu0
        %v1584 = vadd.f32 0.0, %v1583
        %v1585 = vpop.f32.mrf.mxu0
        %1586 = vdwg.mxu0
        %1587 = vmatpush.bf16.msra.mxu0 0
        %1588 = vmatpush.bf16.msra.mxu0 0
        %1589 = vmatpush.bf16.msra.mxu0 0
        %1590 = vmatpush.bf16.msra.mxu0 0
        %1591 = vmatpush.bf16.msra.mxu0 0
        %1592 = vmatpush.bf16.msra.mxu0 0
        %1593 = vmatpush.bf16.msra.mxu0 0
        %1594 = vmatpush.bf16.msra.mxu0 %v1438
        %1595 = vmatmul.bf16.gmra.mxu0 %v1572
        %v1596 = vpop.f32.mrf.mxu0
        %v1597 = vadd.f32 0.0, %v1596
        %v1598 = vpop.f32.mrf.mxu0
        %1599 = vdwg.mxu0
        %v1601 = vsel %vm979, %v1568, 0
        %1603 = vmatpush.bf16.msra.mxu0 0
        %1604 = vmatpush.bf16.msra.mxu0 0
        %1605 = vmatpush.bf16.msra.mxu0 0
        %1606 = vmatpush.bf16.msra.mxu0 0
        %1607 = vmatpush.bf16.msra.mxu0 0
        %1608 = vmatpush.bf16.msra.mxu0 0
        %1609 = vmatpush.bf16.msra.mxu0 0
        %1610 = vmatpush.bf16.msra.mxu0 %v1396
        %1611 = vmatmul.bf16.gmra.mxu0 %v1601
        %v1612 = vpop.f32.mrf.mxu0
        %v1613 = vadd.f32 %v1584, %v1612
        %v1614 = vpop.f32.mrf.mxu0
        %1615 = vdwg.mxu0
        %1616 = vmatpush.bf16.msra.mxu0 0
        %1617 = vmatpush.bf16.msra.mxu0 0
        %1618 = vmatpush.bf16.msra.mxu0 0
        %1619 = vmatpush.bf16.msra.mxu0 0
        %1620 = vmatpush.bf16.msra.mxu0 0
        %1621 = vmatpush.bf16.msra.mxu0 0
        %1622 = vmatpush.bf16.msra.mxu0 0
        %1623 = vmatpush.bf16.msra.mxu0 %v1399
        %1624 = vmatmul.bf16.gmra.mxu0 %v1601
        %v1625 = vpop.f32.mrf.mxu0
        %v1626 = vadd.f32 %v1597, %v1625
        %v1627 = vpop.f32.mrf.mxu0
        %1628 = vdwg.mxu0
        %s1629 = scalar_lea.vmem %s5, 8
        %v1630 = vld [vmem:[%s1629] sm:$0xf]
        %v1632 = vsel %vm979, %v1630, 0
        %1634 = vmatpush.bf16.msra.mxu0 0
        %1635 = vmatpush.bf16.msra.mxu0 0
        %1636 = vmatpush.bf16.msra.mxu0 0
        %1637 = vmatpush.bf16.msra.mxu0 0
        %1638 = vmatpush.bf16.msra.mxu0 0
        %1639 = vmatpush.bf16.msra.mxu0 0
        %1640 = vmatpush.bf16.msra.mxu0 0
        %1641 = vmatpush.bf16.msra.mxu0 %v1505
        %1642 = vmatmul.bf16.gmra.mxu0 %v1632
        %v1643 = vpop.f32.mrf.mxu0
        %v1644 = vadd.f32 0.0, %v1643
        %v1645 = vpop.f32.mrf.mxu0
        %1646 = vdwg.mxu0
        %1647 = vmatpush.bf16.msra.mxu0 0
        %1648 = vmatpush.bf16.msra.mxu0 0
        %1649 = vmatpush.bf16.msra.mxu0 0
        %1650 = vmatpush.bf16.msra.mxu0 0
        %1651 = vmatpush.bf16.msra.mxu0 0
        %1652 = vmatpush.bf16.msra.mxu0 0
        %1653 = vmatpush.bf16.msra.mxu0 0
        %1654 = vmatpush.bf16.msra.mxu0 %v1508
        %1655 = vmatmul.bf16.gmra.mxu0 %v1632
        %v1656 = vpop.f32.mrf.mxu0
        %v1657 = vadd.f32 0.0, %v1656
        %v1658 = vpop.f32.mrf.mxu0
        %1659 = vdwg.mxu0
        %v1660 = vadd.f32 %v1613, %v1644
        %v1661 = vadd.f32 %v1626, %v1657
        %v1662 = vld [vmem:[%s5] sm:$0xf]
        %v1664 = vsel %vm979, %v1662, 0
        %v1667 = vsel %vm983, %v1382, 0
        %v1670 = vsel %vm983, %v1383, 0
        %1672 = vmatpush.bf16.msra.mxu0 0
        %1673 = vmatpush.bf16.msra.mxu0 0
        %1674 = vmatpush.bf16.msra.mxu0 0
        %1675 = vmatpush.bf16.msra.mxu0 0
        %1676 = vmatpush.bf16.msra.mxu0 0
        %1677 = vmatpush.bf16.msra.mxu0 0
        %1678 = vmatpush.bf16.msra.mxu0 0
        %1679 = vmatpush.bf16.msra.mxu0 %v1667
        %1680 = vmatmul.bf16.gmra.mxu0 %v1664
        %v1681 = vpop.f32.mrf.mxu0
        %v1682 = vadd.f32 0.0, %v1681
        %v1683 = vpop.f32.mrf.mxu0
        %1684 = vdwg.mxu0
        %1685 = vmatpush.bf16.msra.mxu0 0
        %1686 = vmatpush.bf16.msra.mxu0 0
        %1687 = vmatpush.bf16.msra.mxu0 0
        %1688 = vmatpush.bf16.msra.mxu0 0
        %1689 = vmatpush.bf16.msra.mxu0 0
        %1690 = vmatpush.bf16.msra.mxu0 0
        %1691 = vmatpush.bf16.msra.mxu0 0
        %1692 = vmatpush.bf16.msra.mxu0 %v1670
        %1693 = vmatmul.bf16.gmra.mxu0 %v1664
        %v1694 = vpop.f32.mrf.mxu0
        %v1695 = vadd.f32 0.0, %v1694
        %v1696 = vpop.f32.mrf.mxu0
        %1697 = vdwg.mxu0
        %v1698 = vadd.f32 %v1660, %v1682
        %v1699 = vadd.f32 %v1661, %v1695
        %v1700 = vadd.f32 %v1698, %v1390
        %v1701 = vadd.f32 %v1699, %v1390
        %1702 = vst [vmem:[%s271] sm:$0xff] %v1411
        %1703 = vst [vmem:[%s271 + $0x8] sm:$0xff] %v1424
        %s1704 = scalar_lea.vmem %s271, 16 [#allocation2]
        %1705 = vst [vmem:[%s1704] sm:$0xff] %v1495
        %1706 = vst [vmem:[%s1704 + $0x8] sm:$0xff] %v1496
        %s1707 = scalar_lea.vmem %s271, 32 [#allocation2]
        %1708 = vst [vmem:[%s1707] sm:$0xff] %v1565
        %1709 = vst [vmem:[%s1707 + $0x8] sm:$0xff] %v1566
        %s1710 = scalar_lea.vmem %s271, 48 [#allocation2]
        %1711 = vst [vmem:[%s1710] sm:$0xff] %v1700
        %1712 = vst [vmem:[%s1710 + $0x8] sm:$0xff] %v1701
        %s1713 = sand.u32 %s181, 1
        %s1714 = scalar_lea.sflag [#allocation3], %s1713
        %s1715 = sand.u32 %s181, 1
        %s1716 = smul.addr %s1715, 64
        %s1717 = scalar_lea.vmem [#allocation2], %s1716
        // Predicated region
        $region49: #{tpu_custom_call.1} parent=47 // pred_check
          %p1718 = pneg %p191
        $region50: #{tpu_custom_call.1} parent=47 // pred_check_branch
          %1720 = sbr.rel (%p1718) target = $region52
        $region51: #{tpu_custom_call.1} parent=47 // pred_region
          %1722 = vsyncadd %s1714, 0
          %s1723 = smul.addr %s21, 8
          %s1724 = smul.addr %s1723, 8
          %s1725 = scalar_lea.hbm %s7, %s1724
          %s1726 = sshll.u32 %s1717, 4
          %s1727 = int_to_ptr.vmem [resolvable:$true] %s1726
          %s1728 = sshll.u32 %s1725, 4
          %s1729 = int_to_ptr.hbm [resolvable:$true] %s1728
          %1734 = dma.vmem_to_hbm [thread:$0]  %s1727, 1024, %s1729, %s1714, 256, 256, 16
        $region52: #{tpu_custom_call.1} parent=47 // pred_fallthru
          _
      $region48: #{tpu_custom_call.1} parent=5 // pred_fallthru
        _
      %p1735 = scmp.le.s32.totalorder 2, %s16
      // Predicated region
      $region53: #{tpu_custom_call.1} parent=5 // pred_check
        %p1736 = pneg %p1735
      $region54: #{tpu_custom_call.1} parent=5 // pred_check_branch
        %1738 = sbr.rel (%p1736) target = $region56
      $region55: #{tpu_custom_call.1} parent=5 // pred_region
        %s1739 = ssub.s32 %s16, 2
        // Predicated region
        $region57: #{tpu_custom_call.1} parent=55 // pred_check
          %p1740 = pneg %p197
        $region58: #{tpu_custom_call.1} parent=55 // pred_check_branch
          %1742 = sbr.rel (%p1740) target = $region60
        $region59: #{tpu_custom_call.1} parent=55 // pred_region
          %s1743 = sand.u32 %s182, 1
          %s1744 = scalar_lea.sflag [#allocation3], %s1743
          %s1745 = sand.u32 %s182, 1
          %s1746 = smul.addr %s1745, 64
          %s1747 = scalar_lea.vmem [#allocation2], %s1746
          %1749 = dma.done %s1744, 1024
        $region60: #{tpu_custom_call.1} parent=55 // pred_fallthru
          _
      $region56: #{tpu_custom_call.1} parent=5 // pred_fallthru
        _
    $region6: #{tpu_custom_call.1} parent=1 // loop_footer
      %s20 = sadd.s32 1, %s16
    $region7: #{tpu_custom_call.1} parent=1 // loop_footer_branch
      %15 = sbr.rel target = $region3
    $region8: #{tpu_custom_call.1} parent=1 // loop_exit
      _
    %1750 = vsyncpa [#allocation3], 1
    %s1751 = scalar_lea.sflag [#allocation3], 1
    %1752 = vsyncpa %s1751, 1

</llo_original>
